<compile_context>
chip_gen: v6e
topology: v6e:2x2x1
jax: 0.10.0
libtpu: 0.0.40
codegen_flags: <defaults>
</compile_context>

<pallas_src>
import math
import jax
import jax.numpy as jnp
from jax.experimental import pallas as pl
from jax.experimental.pallas import tpu as pltpu

HL_DIMS = (150, 200, 150, 100)
IN_OUT = 111
Z_DIM = 128
FINAL_DIM = 100
BN_EPS = 1e-5


def _pad128(n):
    return -(-n // 128) * 128


# Column layout of the activation scratch H (all slots 128-aligned).
SLOT_REAL = (IN_OUT,) + HL_DIMS                         # (111, 150, 200, 150, 100)
SLOT_PAD = tuple(_pad128(w) for w in SLOT_REAL)         # (128, 256, 256, 256, 128)
SLOT_OFF = tuple(sum(SLOT_PAD[:i]) for i in range(5))   # (0, 128, 384, 640, 896)
H_COLS = sum(SLOT_PAD)                                  # 1024
F_PAD = _pad128(FINAL_DIM)                              # 128
W_SLAB_COLS = max(max(SLOT_PAD), F_PAD, 2 * Z_DIM)      # 256

# Row offsets of each (row-permuted, zero-padded) weight block in the W slab.
_row_offsets = []
_r = 0
for _li in range(4):
    _row_offsets.append(_r)
    _r += SLOT_OFF[_li + 1]            # layer li consumes H[:, :SLOT_OFF[li+1]]
_row_offsets.append(_r); _r += H_COLS  # final Linear(711 -> 100) consumes all of H
_row_offsets.append(_r); _r += F_PAD   # fused [mu | logvar] head Linear(100 -> 256)
W_ROW_OFF = tuple(_row_offsets)        # (0, 128, 512, 1152, 2048, 3072)
W_SLAB_ROWS = _r                       # 3200
V_SLAB_ROWS = 16                       # 4*(b,gamma,beta) + bf + b[mu|lv] + pad


def _leaky_relu(x, slope=0.2):
    return jnp.where(x >= 0, x, slope * x)


def encoder_generator_kernel(x_ref, eps_ref, w_ref, v_ref, out_ref, h_ref):
    B = x_ref.shape[0]
    inv_b = 1.0 / B

    # input slot (already zero-padded to 128 lanes in the wrapper)
    h_ref[:, 0:SLOT_PAD[0]] = x_ref[...]

    # --- 4 x hl_loop: Linear -> LeakyReLU -> BatchNorm -> write aligned slot ---
    for li in range(4):
        k_pad = SLOT_OFF[li + 1]        # aligned prefix of H consumed
        out_pad = SLOT_PAD[li + 1]      # aligned slot produced
        wr = W_ROW_OFF[li]
        vr = 3 * li

        W = w_ref[wr:wr + k_pad, 0:out_pad]
        b = v_ref[vr:vr + 1, 0:out_pad]
        gamma = v_ref[vr + 1:vr + 2, 0:out_pad]
        beta = v_ref[vr + 2:vr + 3, 0:out_pad]

        lin = jnp.dot(h_ref[:, 0:k_pad], W,
                      preferred_element_type=jnp.float32) + b
        act = _leaky_relu(lin)

        # Training-mode BatchNorm1d (biased batch stats), fused scale/shift with
        # one-pass statistics; per-element work is a single mul + add.
        mean = jnp.sum(act, axis=0, keepdims=True) * inv_b
        ex2 = jnp.sum(act * act, axis=0, keepdims=True) * inv_b
        var = jnp.maximum(ex2 - mean * mean, 0.0)
        scale = gamma * jax.lax.rsqrt(var + BN_EPS)
        shift = beta - mean * scale

        h_ref[:, k_pad:k_pad + out_pad] = act * scale + shift

    # --- Linear(711 -> 100) + LeakyReLU ---
    wr = W_ROW_OFF[4]
    Wf = w_ref[wr:wr + H_COLS, 0:F_PAD]
    bf = v_ref[12:13, 0:F_PAD]
    f = _leaky_relu(jnp.dot(h_ref[...], Wf,
                            preferred_element_type=jnp.float32) + bf)

    # --- fused [mu | logvar] head (one matmul) + reparameterization ---
    wr = W_ROW_OFF[5]
    Wml = w_ref[wr:wr + F_PAD, 0:2 * Z_DIM]
    bml = v_ref[13:14, 0:2 * Z_DIM]
    ml = jnp.dot(f, Wml, preferred_element_type=jnp.float32) + bml
    mu = ml[:, 0:Z_DIM]               # 128-lane aligned split
    logvar = ml[:, Z_DIM:2 * Z_DIM]

    out_ref[...] = eps_ref[...] * jnp.exp(logvar * 0.5) + mu


# ----------------------------------------------------------------------------
# Parameter construction (PyTorch-style init) and wrapper-side packing.
# ----------------------------------------------------------------------------
def make_params(key):
    """PyTorch-style Linear init (U[-1/sqrt(fan_in), 1/sqrt(fan_in)]).
    Weights stored (in, out).  Returns (hl_layers, heads)."""
    layers = []
    dim = IN_OUT
    for o in HL_DIMS:
        key, k1, k2 = jax.random.split(key, 3)
        bound = 1.0 / math.sqrt(dim)
        W = jax.random.uniform(k1, (dim, o), jnp.float32, -bound, bound)
        b = jax.random.uniform(k2, (o,), jnp.float32, -bound, bound)
        gamma = jnp.ones((o,), jnp.float32)   # BatchNorm1d weight
        beta = jnp.zeros((o,), jnp.float32)   # BatchNorm1d bias
        layers.append((W, b, gamma, beta))
        dim += o
    heads = []
    for i, o in ((dim, FINAL_DIM), (FINAL_DIM, Z_DIM), (FINAL_DIM, Z_DIM)):
        key, k1, k2 = jax.random.split(key, 3)
        bound = 1.0 / math.sqrt(i)
        W = jax.random.uniform(k1, (i, o), jnp.float32, -bound, bound)
        b = jax.random.uniform(k2, (o,), jnp.float32, -bound, bound)
        heads.append((W, b))
    return layers, heads


def _scatter_rows(W, n_prev_bn, out_real, n_rows):
    """Permute PyTorch concat-ordered weight rows [bn_n, ..., bn_1, x] into the
    128-aligned slot layout [x | bn_1 | bn_2 | ...] and zero-pad to the slab."""
    Wp = jnp.zeros((n_rows, W_SLAB_COLS), jnp.float32)
    row = 0
    for j in range(n_prev_bn, 0, -1):
        w_j = HL_DIMS[j - 1]
        Wp = Wp.at[SLOT_OFF[j]:SLOT_OFF[j] + w_j, :out_real].set(W[row:row + w_j, :])
        row += w_j
    Wp = Wp.at[0:IN_OUT, :out_real].set(W[row:row + IN_OUT, :])
    return Wp


def _pad_vec(v, out_real, col_off=0):
    return jnp.zeros((W_SLAB_COLS,), jnp.float32).at[col_off:col_off + out_real].set(v)


def pack_params(layers, heads):
    """Pack all parameters into two pre-padded slabs:
         w_slab (3200, 256) f32 -- all weight matrices, row-stacked
         v_slab (16, 256)   f32 -- all biases / gammas / betas, one per row."""
    w_blocks, v_rows = [], []
    for li, (W, b, gamma, beta) in enumerate(layers):
        out_real = HL_DIMS[li]
        w_blocks.append(_scatter_rows(W, li, out_real, SLOT_OFF[li + 1]))
        v_rows += [_pad_vec(b, out_real), _pad_vec(gamma, out_real),
                   _pad_vec(beta, out_real)]

    Wf, bf = heads[0]
    w_blocks.append(_scatter_rows(Wf, 4, FINAL_DIM, H_COLS))
    v_rows.append(_pad_vec(bf, FINAL_DIM))

    # Fused [mu | logvar] head: column-stack the two (100, 128) weights into one
    # (128, 256) block so the kernel does a single matmul.
    (Wmu, bmu), (Wlv, blv) = heads[1], heads[2]
    Wml = jnp.zeros((F_PAD, W_SLAB_COLS), jnp.float32)
    Wml = Wml.at[:FINAL_DIM, :Z_DIM].set(Wmu)
    Wml = Wml.at[:FINAL_DIM, Z_DIM:2 * Z_DIM].set(Wlv)
    w_blocks.append(Wml)
    bml = (jnp.zeros((W_SLAB_COLS,), jnp.float32)
           .at[:Z_DIM].set(bmu).at[Z_DIM:2 * Z_DIM].set(blv))
    v_rows.append(bml)

    while len(v_rows) < V_SLAB_ROWS:
        v_rows.append(jnp.zeros((W_SLAB_COLS,), jnp.float32))

    w_slab = jnp.concatenate(w_blocks, axis=0)
    v_slab = jnp.stack(v_rows, axis=0)
    assert w_slab.shape == (W_SLAB_ROWS, W_SLAB_COLS)
    assert v_slab.shape == (V_SLAB_ROWS, W_SLAB_COLS)
    return w_slab, v_slab


def encoder_generator(x, eps, w_slab, v_slab):
    B = x.shape[0]
    x_pad = jnp.zeros((B, SLOT_PAD[0]), jnp.float32).at[:, :IN_OUT].set(x)

    flops = 2 * B * sum(ki * ni for ki, ni in
                        ((IN_OUT, 150), (261, 200), (461, 150), (611, 100),
                         (711, FINAL_DIM), (FINAL_DIM, 2 * Z_DIM)))
    cost = pl.CostEstimate(
        flops=flops,
        transcendentals=B * Z_DIM + sum(HL_DIMS),
        bytes_accessed=4 * (int(w_slab.size) + int(v_slab.size)
                            + int(x_pad.size) + int(eps.size) + B * Z_DIM),
    )
    vmem = lambda: pl.BlockSpec(memory_space=pltpu.MemorySpace.VMEM)
    # Everything fits in VMEM (~3.3 MiB of params); a single un-gridded call
    # keeps full-batch BatchNorm semantics and avoids per-tile prologue cost.
    return pl.pallas_call(
        encoder_generator_kernel,
        out_shape=jax.ShapeDtypeStruct((B, Z_DIM), jnp.float32),
        in_specs=[vmem(), vmem(), vmem(), vmem()],
        out_specs=vmem(),
        scratch_shapes=[pltpu.VMEM((B, H_COLS), jnp.float32)],
        cost_estimate=cost,
    )(x_pad, eps, w_slab, v_slab)


# ----------------------------------------------------------------------------
# Pure-JAX reference (unpadded, PyTorch concat ordering) for self-check.
# ----------------------------------------------------------------------------
def reference(x, eps, layers, heads):
    h = x
    for (W, b, gamma, beta) in layers:
        lin = h @ W + b
        act = jnp.where(lin >= 0, lin, 0.2 * lin)
        mean = jnp.mean(act, axis=0, keepdims=True)
        var = jnp.mean((act - mean) ** 2, axis=0, keepdims=True)
        bn = (act - mean) / jnp.sqrt(var + BN_EPS) * gamma + beta
        h = jnp.concatenate([bn, h], axis=1)
    Wf, bf = heads[0]
    f = h @ Wf + bf
    f = jnp.where(f >= 0, f, 0.2 * f)
    mu = f @ heads[1][0] + heads[1][1]
    logvar = f @ heads[2][0] + heads[2][1]
    return eps * jnp.exp(logvar * 0.5) + mu


if __name__ == "__main__":
    key = jax.random.PRNGKey(0)
    k_x, k_eps, k_par = jax.random.split(key, 3)

    B = 8
    x = jax.random.normal(k_x, (B, IN_OUT), dtype=jnp.float32)
    # reparameterization noise (torch.normal(0, 1, (B, z_dim))) drawn outside
    # the kernel as glue, then consumed in-kernel.
    eps = jax.random.normal(k_eps, (B, Z_DIM), dtype=jnp.float32)

    layers, heads = make_params(k_par)
    w_slab, v_slab = pack_params(layers, heads)

    z = encoder_generator(x, eps, w_slab, v_slab)
    jax.block_until_ready(z)
    assert z.shape == (B, Z_DIM) and z.dtype == jnp.float32

    z_ref = reference(x, eps, layers, heads)
    assert jnp.allclose(z, z_ref, rtol=1e-3, atol=1e-3), \
        float(jnp.max(jnp.abs(z - z_ref)))
    print("KERNEL_OK")
</pallas_src>

<mosaic_0001>
module attributes {stable_mosaic.version = 11 : i64} {
  func.func @encoder_generator_kernel(%arg0: memref<8x128xf32, #tpu.memory_space<vmem>>, %arg1: memref<8x128xf32, #tpu.memory_space<vmem>>, %arg2: memref<3200x256xf32, #tpu.memory_space<vmem>>, %arg3: memref<16x256xf32, #tpu.memory_space<vmem>>, %arg4: memref<8x128xf32, #tpu.memory_space<vmem>>, %arg5: memref<8x1024xf32, #tpu.memory_space<vmem>>) attributes {dimension_semantics = [], scalar_prefetch = 0 : i64, scratch_operands = 1 : i64, tpu.core_type = #tpu.core_type<tc>} {
    %c0 = arith.constant 0 : index
    %c0_0 = arith.constant 0 : index
    %0 = vector.load %arg0[%c0, %c0_0] : memref<8x128xf32, #tpu.memory_space<vmem>>, vector<8x128xf32>
    %c0_1 = arith.constant 0 : index
    %c0_2 = arith.constant 0 : index
    %1 = vector.load %arg5[%c0_1, %c0_2] : memref<8x1024xf32, #tpu.memory_space<vmem>>, vector<8x128xf32>
    tpu.vector_store %arg5[%c0_1, %c0_2], %0 {strides = array<i32>} : memref<8x1024xf32, #tpu.memory_space<vmem>>, vector<8x128xf32>,
    %c0_3 = arith.constant 0 : index
    %c0_4 = arith.constant 0 : index
    %2 = vector.load %arg2[%c0_3, %c0_4] : memref<3200x256xf32, #tpu.memory_space<vmem>>, vector<128x256xf32>
    %c0_5 = arith.constant 0 : index
    %c0_6 = arith.constant 0 : index
    %3 = vector.load %arg3[%c0_5, %c0_6] : memref<16x256xf32, #tpu.memory_space<vmem>>, vector<1x256xf32>
    %c1 = arith.constant 1 : index
    %c0_7 = arith.constant 0 : index
    %4 = vector.load %arg3[%c1, %c0_7] : memref<16x256xf32, #tpu.memory_space<vmem>>, vector<1x256xf32>
    %c2 = arith.constant 2 : index
    %c0_8 = arith.constant 0 : index
    %5 = vector.load %arg3[%c2, %c0_8] : memref<16x256xf32, #tpu.memory_space<vmem>>, vector<1x256xf32>
    %c0_9 = arith.constant 0 : index
    %c0_10 = arith.constant 0 : index
    %6 = vector.load %arg5[%c0_9, %c0_10] : memref<8x1024xf32, #tpu.memory_space<vmem>>, vector<8x128xf32>
    %cst = arith.constant dense<0.000000e+00> : vector<8x256xf32>
    %7 = tpu.matmul %6, %2, %cst {dimension_numbers = #tpu.dot_dimension_numbers<[1], [0], [0], [1], [0, 0, 1, 1], [], []>} : vector<8x128xf32>, vector<128x256xf32>, vector<8x256xf32> -> vector<8x256xf32>
    %8 = vector.broadcast %3 : vector<1x256xf32> to vector<8x256xf32>
    %9 = arith.addf %7, %8 : vector<8x256xf32>
    %cst_11 = arith.constant 0.000000e+00 : f32
    %10 = vector.broadcast %cst_11 : f32 to vector<8x256xf32>
    %11 = arith.cmpf oge, %9, %10 : vector<8x256xf32>
    %cst_12 = arith.constant 2.000000e-01 : f32
    %12 = vector.broadcast %cst_12 : f32 to vector<8x256xf32>
    %13 = arith.mulf %12, %9 : vector<8x256xf32>
    %14 = arith.select %11, %9, %13 : vector<8x256xi1>, vector<8x256xf32>
    %cst_13 = arith.constant dense<0.000000e+00> : vector<256xf32>
    %15 = vector.multi_reduction <add>, %14, %cst_13 [0] : vector<8x256xf32> to vector<256xf32>
    %16 = vector.shape_cast %15 : vector<256xf32> to vector<1x256xf32>
    %cst_14 = arith.constant 1.250000e-01 : f32
    %17 = vector.broadcast %cst_14 : f32 to vector<1x256xf32>
    %18 = arith.mulf %16, %17 : vector<1x256xf32>
    %19 = arith.mulf %14, %14 : vector<8x256xf32>
    %cst_15 = arith.constant dense<0.000000e+00> : vector<256xf32>
    %20 = vector.multi_reduction <add>, %19, %cst_15 [0] : vector<8x256xf32> to vector<256xf32>
    %21 = vector.shape_cast %20 : vector<256xf32> to vector<1x256xf32>
    %cst_16 = arith.constant 1.250000e-01 : f32
    %22 = vector.broadcast %cst_16 : f32 to vector<1x256xf32>
    %23 = arith.mulf %21, %22 : vector<1x256xf32>
    %24 = arith.mulf %18, %18 : vector<1x256xf32>
    %25 = arith.subf %23, %24 : vector<1x256xf32>
    %cst_17 = arith.constant 0.000000e+00 : f32
    %26 = vector.broadcast %cst_17 : f32 to vector<1x256xf32>
    %27 = arith.maximumf %25, %26 : vector<1x256xf32>
    %cst_18 = arith.constant 9.99999974E-6 : f32
    %28 = vector.broadcast %cst_18 : f32 to vector<1x256xf32>
    %29 = arith.addf %27, %28 : vector<1x256xf32>
    %30 = math.rsqrt %29 : vector<1x256xf32>
    %31 = arith.mulf %4, %30 : vector<1x256xf32>
    %32 = arith.mulf %18, %31 : vector<1x256xf32>
    %33 = arith.subf %5, %32 : vector<1x256xf32>
    %34 = vector.broadcast %31 : vector<1x256xf32> to vector<8x256xf32>
    %35 = arith.mulf %14, %34 : vector<8x256xf32>
    %36 = vector.broadcast %33 : vector<1x256xf32> to vector<8x256xf32>
    %37 = arith.addf %35, %36 : vector<8x256xf32>
    %c0_19 = arith.constant 0 : index
    %c128 = arith.constant 128 : index
    %38 = vector.load %arg5[%c0_19, %c128] : memref<8x1024xf32, #tpu.memory_space<vmem>>, vector<8x256xf32>
    tpu.vector_store %arg5[%c0_19, %c128], %37 {strides = array<i32>} : memref<8x1024xf32, #tpu.memory_space<vmem>>, vector<8x256xf32>,
    %c128_20 = arith.constant 128 : index
    %c0_21 = arith.constant 0 : index
    %39 = vector.load %arg2[%c128_20, %c0_21] : memref<3200x256xf32, #tpu.memory_space<vmem>>, vector<384x256xf32>
    %c3 = arith.constant 3 : index
    %c0_22 = arith.constant 0 : index
    %40 = vector.load %arg3[%c3, %c0_22] : memref<16x256xf32, #tpu.memory_space<vmem>>, vector<1x256xf32>
    %c4 = arith.constant 4 : index
    %c0_23 = arith.constant 0 : index
    %41 = vector.load %arg3[%c4, %c0_23] : memref<16x256xf32, #tpu.memory_space<vmem>>, vector<1x256xf32>
    %c5 = arith.constant 5 : index
    %c0_24 = arith.constant 0 : index
    %42 = vector.load %arg3[%c5, %c0_24] : memref<16x256xf32, #tpu.memory_space<vmem>>, vector<1x256xf32>
    %c0_25 = arith.constant 0 : index
    %c0_26 = arith.constant 0 : index
    %43 = vector.load %arg5[%c0_25, %c0_26] : memref<8x1024xf32, #tpu.memory_space<vmem>>, vector<8x384xf32>
    %cst_27 = arith.constant dense<0.000000e+00> : vector<8x256xf32>
    %44 = tpu.matmul %43, %39, %cst_27 {dimension_numbers = #tpu.dot_dimension_numbers<[1], [0], [0], [1], [0, 0, 1, 1], [], []>} : vector<8x384xf32>, vector<384x256xf32>, vector<8x256xf32> -> vector<8x256xf32>
    %45 = vector.broadcast %40 : vector<1x256xf32> to vector<8x256xf32>
    %46 = arith.addf %44, %45 : vector<8x256xf32>
    %cst_28 = arith.constant 0.000000e+00 : f32
    %47 = vector.broadcast %cst_28 : f32 to vector<8x256xf32>
    %48 = arith.cmpf oge, %46, %47 : vector<8x256xf32>
    %cst_29 = arith.constant 2.000000e-01 : f32
    %49 = vector.broadcast %cst_29 : f32 to vector<8x256xf32>
    %50 = arith.mulf %49, %46 : vector<8x256xf32>
    %51 = arith.select %48, %46, %50 : vector<8x256xi1>, vector<8x256xf32>
    %cst_30 = arith.constant dense<0.000000e+00> : vector<256xf32>
    %52 = vector.multi_reduction <add>, %51, %cst_30 [0] : vector<8x256xf32> to vector<256xf32>
    %53 = vector.shape_cast %52 : vector<256xf32> to vector<1x256xf32>
    %cst_31 = arith.constant 1.250000e-01 : f32
    %54 = vector.broadcast %cst_31 : f32 to vector<1x256xf32>
    %55 = arith.mulf %53, %54 : vector<1x256xf32>
    %56 = arith.mulf %51, %51 : vector<8x256xf32>
    %cst_32 = arith.constant dense<0.000000e+00> : vector<256xf32>
    %57 = vector.multi_reduction <add>, %56, %cst_32 [0] : vector<8x256xf32> to vector<256xf32>
    %58 = vector.shape_cast %57 : vector<256xf32> to vector<1x256xf32>
    %cst_33 = arith.constant 1.250000e-01 : f32
    %59 = vector.broadcast %cst_33 : f32 to vector<1x256xf32>
    %60 = arith.mulf %58, %59 : vector<1x256xf32>
    %61 = arith.mulf %55, %55 : vector<1x256xf32>
    %62 = arith.subf %60, %61 : vector<1x256xf32>
    %cst_34 = arith.constant 0.000000e+00 : f32
    %63 = vector.broadcast %cst_34 : f32 to vector<1x256xf32>
    %64 = arith.maximumf %62, %63 : vector<1x256xf32>
    %cst_35 = arith.constant 9.99999974E-6 : f32
    %65 = vector.broadcast %cst_35 : f32 to vector<1x256xf32>
    %66 = arith.addf %64, %65 : vector<1x256xf32>
    %67 = math.rsqrt %66 : vector<1x256xf32>
    %68 = arith.mulf %41, %67 : vector<1x256xf32>
    %69 = arith.mulf %55, %68 : vector<1x256xf32>
    %70 = arith.subf %42, %69 : vector<1x256xf32>
    %71 = vector.broadcast %68 : vector<1x256xf32> to vector<8x256xf32>
    %72 = arith.mulf %51, %71 : vector<8x256xf32>
    %73 = vector.broadcast %70 : vector<1x256xf32> to vector<8x256xf32>
    %74 = arith.addf %72, %73 : vector<8x256xf32>
    %c0_36 = arith.constant 0 : index
    %c384 = arith.constant 384 : index
    %75 = vector.load %arg5[%c0_36, %c384] : memref<8x1024xf32, #tpu.memory_space<vmem>>, vector<8x256xf32>
    tpu.vector_store %arg5[%c0_36, %c384], %74 {strides = array<i32>} : memref<8x1024xf32, #tpu.memory_space<vmem>>, vector<8x256xf32>,
    %c512 = arith.constant 512 : index
    %c0_37 = arith.constant 0 : index
    %76 = vector.load %arg2[%c512, %c0_37] : memref<3200x256xf32, #tpu.memory_space<vmem>>, vector<640x256xf32>
    %c6 = arith.constant 6 : index
    %c0_38 = arith.constant 0 : index
    %77 = vector.load %arg3[%c6, %c0_38] : memref<16x256xf32, #tpu.memory_space<vmem>>, vector<1x256xf32>
    %c7 = arith.constant 7 : index
    %c0_39 = arith.constant 0 : index
    %78 = vector.load %arg3[%c7, %c0_39] : memref<16x256xf32, #tpu.memory_space<vmem>>, vector<1x256xf32>
    %c8 = arith.constant 8 : index
    %c0_40 = arith.constant 0 : index
    %79 = vector.load %arg3[%c8, %c0_40] : memref<16x256xf32, #tpu.memory_space<vmem>>, vector<1x256xf32>
    %c0_41 = arith.constant 0 : index
    %c0_42 = arith.constant 0 : index
    %80 = vector.load %arg5[%c0_41, %c0_42] : memref<8x1024xf32, #tpu.memory_space<vmem>>, vector<8x640xf32>
    %cst_43 = arith.constant dense<0.000000e+00> : vector<8x256xf32>
    %81 = tpu.matmul %80, %76, %cst_43 {dimension_numbers = #tpu.dot_dimension_numbers<[1], [0], [0], [1], [0, 0, 1, 1], [], []>} : vector<8x640xf32>, vector<640x256xf32>, vector<8x256xf32> -> vector<8x256xf32>
    %82 = vector.broadcast %77 : vector<1x256xf32> to vector<8x256xf32>
    %83 = arith.addf %81, %82 : vector<8x256xf32>
    %cst_44 = arith.constant 0.000000e+00 : f32
    %84 = vector.broadcast %cst_44 : f32 to vector<8x256xf32>
    %85 = arith.cmpf oge, %83, %84 : vector<8x256xf32>
    %cst_45 = arith.constant 2.000000e-01 : f32
    %86 = vector.broadcast %cst_45 : f32 to vector<8x256xf32>
    %87 = arith.mulf %86, %83 : vector<8x256xf32>
    %88 = arith.select %85, %83, %87 : vector<8x256xi1>, vector<8x256xf32>
    %cst_46 = arith.constant dense<0.000000e+00> : vector<256xf32>
    %89 = vector.multi_reduction <add>, %88, %cst_46 [0] : vector<8x256xf32> to vector<256xf32>
    %90 = vector.shape_cast %89 : vector<256xf32> to vector<1x256xf32>
    %cst_47 = arith.constant 1.250000e-01 : f32
    %91 = vector.broadcast %cst_47 : f32 to vector<1x256xf32>
    %92 = arith.mulf %90, %91 : vector<1x256xf32>
    %93 = arith.mulf %88, %88 : vector<8x256xf32>
    %cst_48 = arith.constant dense<0.000000e+00> : vector<256xf32>
    %94 = vector.multi_reduction <add>, %93, %cst_48 [0] : vector<8x256xf32> to vector<256xf32>
    %95 = vector.shape_cast %94 : vector<256xf32> to vector<1x256xf32>
    %cst_49 = arith.constant 1.250000e-01 : f32
    %96 = vector.broadcast %cst_49 : f32 to vector<1x256xf32>
    %97 = arith.mulf %95, %96 : vector<1x256xf32>
    %98 = arith.mulf %92, %92 : vector<1x256xf32>
    %99 = arith.subf %97, %98 : vector<1x256xf32>
    %cst_50 = arith.constant 0.000000e+00 : f32
    %100 = vector.broadcast %cst_50 : f32 to vector<1x256xf32>
    %101 = arith.maximumf %99, %100 : vector<1x256xf32>
    %cst_51 = arith.constant 9.99999974E-6 : f32
    %102 = vector.broadcast %cst_51 : f32 to vector<1x256xf32>
    %103 = arith.addf %101, %102 : vector<1x256xf32>
    %104 = math.rsqrt %103 : vector<1x256xf32>
    %105 = arith.mulf %78, %104 : vector<1x256xf32>
    %106 = arith.mulf %92, %105 : vector<1x256xf32>
    %107 = arith.subf %79, %106 : vector<1x256xf32>
    %108 = vector.broadcast %105 : vector<1x256xf32> to vector<8x256xf32>
    %109 = arith.mulf %88, %108 : vector<8x256xf32>
    %110 = vector.broadcast %107 : vector<1x256xf32> to vector<8x256xf32>
    %111 = arith.addf %109, %110 : vector<8x256xf32>
    %c0_52 = arith.constant 0 : index
    %c640 = arith.constant 640 : index
    %112 = vector.load %arg5[%c0_52, %c640] : memref<8x1024xf32, #tpu.memory_space<vmem>>, vector<8x256xf32>
    tpu.vector_store %arg5[%c0_52, %c640], %111 {strides = array<i32>} : memref<8x1024xf32, #tpu.memory_space<vmem>>, vector<8x256xf32>,
    %c1152 = arith.constant 1152 : index
    %c0_53 = arith.constant 0 : index
    %113 = vector.load %arg2[%c1152, %c0_53] : memref<3200x256xf32, #tpu.memory_space<vmem>>, vector<896x128xf32>
    %c9 = arith.constant 9 : index
    %c0_54 = arith.constant 0 : index
    %114 = vector.load %arg3[%c9, %c0_54] : memref<16x256xf32, #tpu.memory_space<vmem>>, vector<1x128xf32>
    %c10 = arith.constant 10 : index
    %c0_55 = arith.constant 0 : index
    %115 = vector.load %arg3[%c10, %c0_55] : memref<16x256xf32, #tpu.memory_space<vmem>>, vector<1x128xf32>
    %c11 = arith.constant 11 : index
    %c0_56 = arith.constant 0 : index
    %116 = vector.load %arg3[%c11, %c0_56] : memref<16x256xf32, #tpu.memory_space<vmem>>, vector<1x128xf32>
    %c0_57 = arith.constant 0 : index
    %c0_58 = arith.constant 0 : index
    %117 = vector.load %arg5[%c0_57, %c0_58] : memref<8x1024xf32, #tpu.memory_space<vmem>>, vector<8x896xf32>
    %cst_59 = arith.constant dense<0.000000e+00> : vector<8x128xf32>
    %118 = tpu.matmul %117, %113, %cst_59 {dimension_numbers = #tpu.dot_dimension_numbers<[1], [0], [0], [1], [0, 0, 1, 1], [], []>} : vector<8x896xf32>, vector<896x128xf32>, vector<8x128xf32> -> vector<8x128xf32>
    %119 = vector.broadcast %114 : vector<1x128xf32> to vector<8x128xf32>
    %120 = arith.addf %118, %119 : vector<8x128xf32>
    %cst_60 = arith.constant 0.000000e+00 : f32
    %121 = vector.broadcast %cst_60 : f32 to vector<8x128xf32>
    %122 = arith.cmpf oge, %120, %121 : vector<8x128xf32>
    %cst_61 = arith.constant 2.000000e-01 : f32
    %123 = vector.broadcast %cst_61 : f32 to vector<8x128xf32>
    %124 = arith.mulf %123, %120 : vector<8x128xf32>
    %125 = arith.select %122, %120, %124 : vector<8x128xi1>, vector<8x128xf32>
    %cst_62 = arith.constant dense<0.000000e+00> : vector<128xf32>
    %126 = vector.multi_reduction <add>, %125, %cst_62 [0] : vector<8x128xf32> to vector<128xf32>
    %127 = vector.shape_cast %126 : vector<128xf32> to vector<1x128xf32>
    %cst_63 = arith.constant 1.250000e-01 : f32
    %128 = vector.broadcast %cst_63 : f32 to vector<1x128xf32>
    %129 = arith.mulf %127, %128 : vector<1x128xf32>
    %130 = arith.mulf %125, %125 : vector<8x128xf32>
    %cst_64 = arith.constant dense<0.000000e+00> : vector<128xf32>
    %131 = vector.multi_reduction <add>, %130, %cst_64 [0] : vector<8x128xf32> to vector<128xf32>
    %132 = vector.shape_cast %131 : vector<128xf32> to vector<1x128xf32>
    %cst_65 = arith.constant 1.250000e-01 : f32
    %133 = vector.broadcast %cst_65 : f32 to vector<1x128xf32>
    %134 = arith.mulf %132, %133 : vector<1x128xf32>
    %135 = arith.mulf %129, %129 : vector<1x128xf32>
    %136 = arith.subf %134, %135 : vector<1x128xf32>
    %cst_66 = arith.constant 0.000000e+00 : f32
    %137 = vector.broadcast %cst_66 : f32 to vector<1x128xf32>
    %138 = arith.maximumf %136, %137 : vector<1x128xf32>
    %cst_67 = arith.constant 9.99999974E-6 : f32
    %139 = vector.broadcast %cst_67 : f32 to vector<1x128xf32>
    %140 = arith.addf %138, %139 : vector<1x128xf32>
    %141 = math.rsqrt %140 : vector<1x128xf32>
    %142 = arith.mulf %115, %141 : vector<1x128xf32>
    %143 = arith.mulf %129, %142 : vector<1x128xf32>
    %144 = arith.subf %116, %143 : vector<1x128xf32>
    %145 = vector.broadcast %142 : vector<1x128xf32> to vector<8x128xf32>
    %146 = arith.mulf %125, %145 : vector<8x128xf32>
    %147 = vector.broadcast %144 : vector<1x128xf32> to vector<8x128xf32>
    %148 = arith.addf %146, %147 : vector<8x128xf32>
    %c0_68 = arith.constant 0 : index
    %c896 = arith.constant 896 : index
    %149 = vector.load %arg5[%c0_68, %c896] : memref<8x1024xf32, #tpu.memory_space<vmem>>, vector<8x128xf32>
    tpu.vector_store %arg5[%c0_68, %c896], %148 {strides = array<i32>} : memref<8x1024xf32, #tpu.memory_space<vmem>>, vector<8x128xf32>,
    %c2048 = arith.constant 2048 : index
    %c0_69 = arith.constant 0 : index
    %150 = vector.load %arg2[%c2048, %c0_69] : memref<3200x256xf32, #tpu.memory_space<vmem>>, vector<1024x128xf32>
    %c12 = arith.constant 12 : index
    %c0_70 = arith.constant 0 : index
    %151 = vector.load %arg3[%c12, %c0_70] : memref<16x256xf32, #tpu.memory_space<vmem>>, vector<1x128xf32>
    %c0_71 = arith.constant 0 : index
    %c0_72 = arith.constant 0 : index
    %152 = vector.load %arg5[%c0_71, %c0_72] : memref<8x1024xf32, #tpu.memory_space<vmem>>, vector<8x1024xf32>
    %cst_73 = arith.constant dense<0.000000e+00> : vector<8x128xf32>
    %153 = tpu.matmul %152, %150, %cst_73 {dimension_numbers = #tpu.dot_dimension_numbers<[1], [0], [0], [1], [0, 0, 1, 1], [], []>} : vector<8x1024xf32>, vector<1024x128xf32>, vector<8x128xf32> -> vector<8x128xf32>
    %154 = vector.broadcast %151 : vector<1x128xf32> to vector<8x128xf32>
    %155 = arith.addf %153, %154 : vector<8x128xf32>
    %cst_74 = arith.constant 0.000000e+00 : f32
    %156 = vector.broadcast %cst_74 : f32 to vector<8x128xf32>
    %157 = arith.cmpf oge, %155, %156 : vector<8x128xf32>
    %cst_75 = arith.constant 2.000000e-01 : f32
    %158 = vector.broadcast %cst_75 : f32 to vector<8x128xf32>
    %159 = arith.mulf %158, %155 : vector<8x128xf32>
    %160 = arith.select %157, %155, %159 : vector<8x128xi1>, vector<8x128xf32>
    %c3072 = arith.constant 3072 : index
    %c0_76 = arith.constant 0 : index
    %161 = vector.load %arg2[%c3072, %c0_76] : memref<3200x256xf32, #tpu.memory_space<vmem>>, vector<128x256xf32>
    %c13 = arith.constant 13 : index
    %c0_77 = arith.constant 0 : index
    %162 = vector.load %arg3[%c13, %c0_77] : memref<16x256xf32, #tpu.memory_space<vmem>>, vector<1x256xf32>
    %cst_78 = arith.constant dense<0.000000e+00> : vector<8x256xf32>
    %163 = tpu.matmul %160, %161, %cst_78 {dimension_numbers = #tpu.dot_dimension_numbers<[1], [0], [0], [1], [0, 0, 1, 1], [], []>} : vector<8x128xf32>, vector<128x256xf32>, vector<8x256xf32> -> vector<8x256xf32>
    %164 = vector.broadcast %162 : vector<1x256xf32> to vector<8x256xf32>
    %165 = arith.addf %163, %164 : vector<8x256xf32>
    %166 = vector.extract_strided_slice %165 {offsets = [0, 0], sizes = [8, 128], strides = [1, 1]} : vector<8x256xf32> to vector<8x128xf32>
    %167 = vector.extract_strided_slice %165 {offsets = [0, 128], sizes = [8, 128], strides = [1, 1]} : vector<8x256xf32> to vector<8x128xf32>
    %c0_79 = arith.constant 0 : index
    %c0_80 = arith.constant 0 : index
    %168 = vector.load %arg1[%c0_79, %c0_80] : memref<8x128xf32, #tpu.memory_space<vmem>>, vector<8x128xf32>
    %cst_81 = arith.constant 5.000000e-01 : f32
    %169 = vector.broadcast %cst_81 : f32 to vector<8x128xf32>
    %170 = arith.mulf %167, %169 : vector<8x128xf32>
    %171 = math.exp %170 : vector<8x128xf32>
    %172 = arith.mulf %168, %171 : vector<8x128xf32>
    %173 = arith.addf %172, %166 : vector<8x128xf32>
    %c0_82 = arith.constant 0 : index
    %c0_83 = arith.constant 0 : index
    %174 = vector.load %arg4[%c0_82, %c0_83] : memref<8x128xf32, #tpu.memory_space<vmem>>, vector<8x128xf32>
    tpu.vector_store %arg4[%c0_82, %c0_83], %173 {strides = array<i32>} : memref<8x128xf32, #tpu.memory_space<vmem>>, vector<8x128xf32>,
    return
  }
}

</mosaic_0001>

<llo_original>
// kernel: tpu_custom_call.1
$region0: #{tpu_custom_call.1}
  #allocation0 [shape = 'u32[]', space=smem, size = 0x4, offset = 0x4, fixed_abs, tag = 'smem constant byte address 0x4 - core index']
  #allocation1 [shape = 'u32[144,128]{1,0:T(1,128)}', space=vmem, size = 0x12000, scoped, tag = 'internal scratch']
  #allocation2 [shape = 'f32[8,1024]{1,0:T(8,128)}', space=vmem, size = 0x8000, scoped, tag = 'scratch operand']
  %s0 = inlined_call_operand.hbm [shape: f32[8,128], index: 0, kind: input, shape index: {}]
  %s1 = inlined_call_operand.hbm [shape: f32[8,128], index: 1, kind: input, shape index: {}]
  %s2 = inlined_call_operand.hbm [shape: f32[3200,256], index: 2, kind: input, shape index: {}]
  %s3 = inlined_call_operand.hbm [shape: f32[16,256], index: 3, kind: input, shape index: {}]
  %s4 = inlined_call_operand.hbm [shape: f32[8,128], index: 4, kind: output, shape index: {}]
  %s5 = sld [smem:[#allocation0]]
  $region42: #{tpu_custom_call.1} parent=0
    _
  %s7 = ssub.s32 1, %s5
  %s8 = scalar_select 0, %s7, %s5
  $region1: #{tpu_custom_call.1} parent=0
    #allocation3 [shape = 'u8[4096]{0}', space=vmem, size = 0x1000, scoped, tag = 'input window, operand 0, single buffered']
    #allocation4 [shape = 's32[1]{0}', space=sflag, size = 0x4, scoped, tag = 'scoped memory for tpu_custom_call.1']
    #allocation5 [shape = 's32[1]{0}', space=sflag, size = 0x4, scoped, tag = 'scoped memory for tpu_custom_call.1']
    #allocation6 [shape = 'u8[4096]{0}', space=vmem, size = 0x1000, scoped, tag = 'input window, operand 1, single buffered']
    #allocation7 [shape = 's32[1]{0}', space=sflag, size = 0x4, scoped, tag = 'scoped memory for tpu_custom_call.1']
    #allocation8 [shape = 'u8[3276800]{0}', space=vmem, size = 0x320000, scoped, tag = 'input window, operand 2, single buffered']
    #allocation9 [shape = 'u8[16384]{0}', space=vmem, size = 0x4000, scoped, tag = 'input window, operand 3, single buffered']
    #allocation10 [shape = 's32[1]{0}', space=sflag, size = 0x4, scoped, tag = 'scoped memory for tpu_custom_call.1']
    #allocation11 [shape = 'u8[4096]{0}', space=vmem, size = 0x1000, scoped, tag = 'output window, operand 0, single buffered']
    %9 = vsyncpa [#allocation4], 0
    %10 = vsyncpa [#allocation7], 0
    %11 = vsyncpa [#allocation10], 0
    %12 = vsyncpa [#allocation5], 0
    // Predicated region
    $region2: #{tpu_custom_call.1} parent=1 // pred_check
      _
    $region3: #{tpu_custom_call.1} parent=1 // pred_check_branch
      %14 = sbr.rel (0) target = $region5
    $region4: #{tpu_custom_call.1} parent=1 // pred_region
      %s16 = ssub.s32 128, 128
      %17 = vsyncadd [#allocation4], %s16
      %s19 = sshll.u32 [#allocation3], 4
      %s20 = int_to_ptr.vmem [resolvable:$true] %s19
      %22 = dma.hbm_to_vmem [thread:$0]  %s0, 128, %s20, [#allocation4]
    $region5: #{tpu_custom_call.1} parent=1 // pred_fallthru
      _
    // Predicated region
    $region6: #{tpu_custom_call.1} parent=1 // pred_check
      _
    $region7: #{tpu_custom_call.1} parent=1 // pred_check_branch
      %24 = sbr.rel (0) target = $region9
    $region8: #{tpu_custom_call.1} parent=1 // pred_region
      %s26 = ssub.s32 128, 128
      %27 = vsyncadd [#allocation7], %s26
      %s29 = sshll.u32 [#allocation6], 4
      %s30 = int_to_ptr.vmem [resolvable:$true] %s29
      %32 = dma.hbm_to_vmem [thread:$0]  %s1, 128, %s30, [#allocation7]
    $region9: #{tpu_custom_call.1} parent=1 // pred_fallthru
      _
    // Predicated region
    $region10: #{tpu_custom_call.1} parent=1 // pred_check
      _
    $region11: #{tpu_custom_call.1} parent=1 // pred_check_branch
      %34 = sbr.rel (0) target = $region13
    $region12: #{tpu_custom_call.1} parent=1 // pred_region
      %s36 = ssub.s32 102400, 102400
      %37 = vsyncadd [#allocation7], %s36
      %s38 = sshll.u32 [#allocation8], 4
      %s39 = int_to_ptr.vmem [resolvable:$true] %s38
      %44 = dma.hbm_to_vmem [thread:$0]  %s2, 102400, %s39, [#allocation7], 256, 256, 16
    $region13: #{tpu_custom_call.1} parent=1 // pred_fallthru
      _
    // Predicated region
    $region14: #{tpu_custom_call.1} parent=1 // pred_check
      _
    $region15: #{tpu_custom_call.1} parent=1 // pred_check_branch
      %46 = sbr.rel (0) target = $region17
    $region16: #{tpu_custom_call.1} parent=1 // pred_region
      %s48 = ssub.s32 512, 512
      %49 = vsyncadd [#allocation10], %s48
      %s50 = sshll.u32 [#allocation9], 4
      %s51 = int_to_ptr.vmem [resolvable:$true] %s50
      %56 = dma.hbm_to_vmem [thread:$0]  %s3, 512, %s51, [#allocation10], 256, 256, 16
    $region17: #{tpu_custom_call.1} parent=1 // pred_fallthru
      _
    // Predicated region
    $region18: #{tpu_custom_call.1} parent=1 // pred_check
      _
    $region19: #{tpu_custom_call.1} parent=1 // pred_check_branch
      %58 = sbr.rel (0) target = $region21
    $region20: #{tpu_custom_call.1} parent=1 // pred_region
      %59 = dma.done [#allocation4], 128
    $region21: #{tpu_custom_call.1} parent=1 // pred_fallthru
      _
    // Predicated region
    $region22: #{tpu_custom_call.1} parent=1 // pred_check
      _
    $region23: #{tpu_custom_call.1} parent=1 // pred_check_branch
      %61 = sbr.rel (0) target = $region25
    $region24: #{tpu_custom_call.1} parent=1 // pred_region
      %62 = dma.done [#allocation7], 128
    $region25: #{tpu_custom_call.1} parent=1 // pred_fallthru
      _
    // Predicated region
    $region26: #{tpu_custom_call.1} parent=1 // pred_check
      _
    $region27: #{tpu_custom_call.1} parent=1 // pred_check_branch
      %64 = sbr.rel (0) target = $region29
    $region28: #{tpu_custom_call.1} parent=1 // pred_region
      %65 = dma.done [#allocation7], 102400
    $region29: #{tpu_custom_call.1} parent=1 // pred_fallthru
      _
    // Predicated region
    $region30: #{tpu_custom_call.1} parent=1 // pred_check
      _
    $region31: #{tpu_custom_call.1} parent=1 // pred_check_branch
      %67 = sbr.rel (0) target = $region33
    $region32: #{tpu_custom_call.1} parent=1 // pred_region
      %68 = dma.done [#allocation10], 512
    $region33: #{tpu_custom_call.1} parent=1 // pred_fallthru
      _
    %v69 = vld [vmem:[#allocation3] sm:$0xff]
    %70 = vst [vmem:[#allocation2] sm:$0xff] %v69
    %v71 = vld [vmem:[#allocation8] sm:$0xff]
    %v72 = vld [vmem:[#allocation8 + $0x8] sm:$0xff]
    %v73 = vld [vmem:[#allocation8 + $0x10] sm:$0xff]
    %v74 = vld [vmem:[#allocation8 + $0x18] sm:$0xff]
    %v75 = vld [vmem:[#allocation8 + $0x20] sm:$0xff]
    %v76 = vld [vmem:[#allocation8 + $0x28] sm:$0xff]
    %v77 = vld [vmem:[#allocation8 + $0x30] sm:$0xff]
    %v78 = vld [vmem:[#allocation8 + $0x38] sm:$0xff]
    %v79 = vld [vmem:[#allocation8 + $0x40] sm:$0xff]
    %v80 = vld [vmem:[#allocation8 + $0x48] sm:$0xff]
    %v81 = vld [vmem:[#allocation8 + $0x50] sm:$0xff]
    %v82 = vld [vmem:[#allocation8 + $0x58] sm:$0xff]
    %v83 = vld [vmem:[#allocation8 + $0x60] sm:$0xff]
    %v84 = vld [vmem:[#allocation8 + $0x68] sm:$0xff]
    %v85 = vld [vmem:[#allocation8 + $0x70] sm:$0xff]
    %v86 = vld [vmem:[#allocation8 + $0x78] sm:$0xff]
    %v87 = vld [vmem:[#allocation8 + $0x80] sm:$0xff]
    %v88 = vld [vmem:[#allocation8 + $0x88] sm:$0xff]
    %v89 = vld [vmem:[#allocation8 + $0x90] sm:$0xff]
    %v90 = vld [vmem:[#allocation8 + $0x98] sm:$0xff]
    %v91 = vld [vmem:[#allocation8 + $0xa0] sm:$0xff]
    %v92 = vld [vmem:[#allocation8 + $0xa8] sm:$0xff]
    %v93 = vld [vmem:[#allocation8 + $0xb0] sm:$0xff]
    %v94 = vld [vmem:[#allocation8 + $0xb8] sm:$0xff]
    %v95 = vld [vmem:[#allocation8 + $0xc0] sm:$0xff]
    %v96 = vld [vmem:[#allocation8 + $0xc8] sm:$0xff]
    %v97 = vld [vmem:[#allocation8 + $0xd0] sm:$0xff]
    %v98 = vld [vmem:[#allocation8 + $0xd8] sm:$0xff]
    %v99 = vld [vmem:[#allocation8 + $0xe0] sm:$0xff]
    %v100 = vld [vmem:[#allocation8 + $0xe8] sm:$0xff]
    %v101 = vld [vmem:[#allocation8 + $0xf0] sm:$0xff]
    %v102 = vld [vmem:[#allocation8 + $0xf8] sm:$0xff]
    %v103 = vld [vmem:[#allocation9] ss:$8 sm:$0x3]
    %s104 = scalar_lea.vmem [#allocation9], 1
    %v105 = vld [vmem:[%s104] ss:$8 sm:$0x3]
    %s106 = scalar_lea.vmem [#allocation9], 2
    %v107 = vld [vmem:[%s106] ss:$8 sm:$0x3]
    %v108 = vld [vmem:[#allocation2] sm:$0xff]
    %v110 = vlaneseq
    %v111 = vshrl.u32 %v110, 7
    %v112 = vsub.s32 0, %v111
    %v113 = vrot.slane %v103, %v112
    %v114 = vlaneseq
    %v115 = vshrl.u32 %v114, 7
    %v116 = vsub.s32 1, %v115
    %v117 = vrot.slane %v103, %v116
    %120 = vmatprep.subr.mxu0 %v102
    %121 = vmatpush1.msra.mxu0 %v101
    %122 = vmatprep.subr.mxu0 %v100
    %123 = vmatpush1.msra.mxu0 %v99
    %124 = vmatprep.subr.mxu0 %v98
    %125 = vmatpush1.msra.mxu0 %v97
    %126 = vmatprep.subr.mxu0 %v96
    %127 = vmatpush1.msra.mxu0 %v95
    %128 = vmatprep.subr.mxu0 %v94
    %129 = vmatpush1.msra.mxu0 %v93
    %130 = vmatprep.subr.mxu0 %v92
    %131 = vmatpush1.msra.mxu0 %v91
    %132 = vmatprep.subr.mxu0 %v90
    %133 = vmatpush1.msra.mxu0 %v89
    %134 = vmatprep.subr.mxu0 %v88
    %135 = vmatpush1.msra.mxu0 %v87
    %136 = vmatprep.subr.mxu0 %v86
    %137 = vmatpush1.msra.mxu0 %v85
    %138 = vmatprep.subr.mxu0 %v84
    %139 = vmatpush1.msra.mxu0 %v83
    %140 = vmatprep.subr.mxu0 %v82
    %141 = vmatpush1.msra.mxu0 %v81
    %142 = vmatprep.subr.mxu0 %v80
    %143 = vmatpush1.msra.mxu0 %v79
    %144 = vmatprep.subr.mxu0 %v78
    %145 = vmatpush1.msra.mxu0 %v77
    %146 = vmatprep.subr.mxu0 %v76
    %147 = vmatpush1.msra.mxu0 %v75
    %148 = vmatprep.subr.mxu0 %v74
    %149 = vmatpush1.msra.mxu0 %v73
    %150 = vmatprep.subr.mxu0 %v72
    %151 = vmatpush1.msra.mxu0 %v71
    %152 = vmatprep.subr.mxu0 0.0
    %153 = vmatpush2.msra.mxu0 0.0
    %154 = vmatprep.subr.mxu0 0.0
    %155 = vmatpush2.msra.mxu0 0.0
    %156 = vmatprep.subr.mxu0 0.0
    %157 = vmatpush2.msra.mxu0 0.0
    %158 = vmatprep.subr.mxu0 0.0
    %159 = vmatpush2.msra.mxu0 0.0
    %160 = vmatprep.subr.mxu0 0.0
    %161 = vmatpush2.msra.mxu0 0.0
    %162 = vmatprep.subr.mxu0 0.0
    %163 = vmatpush2.msra.mxu0 0.0
    %164 = vmatprep.subr.mxu0 0.0
    %165 = vmatpush2.msra.mxu0 0.0
    %166 = vmatprep.subr.mxu0 0.0
    %167 = vmatpush2.msra.mxu0 0.0
    %168 = vmatprep.subr.mxu0 0.0
    %169 = vmatpush2.msra.mxu0 0.0
    %170 = vmatprep.subr.mxu0 0.0
    %171 = vmatpush2.msra.mxu0 0.0
    %172 = vmatprep.subr.mxu0 0.0
    %173 = vmatpush2.msra.mxu0 0.0
    %174 = vmatprep.subr.mxu0 0.0
    %175 = vmatpush2.msra.mxu0 0.0
    %176 = vmatprep.subr.mxu0 0.0
    %177 = vmatpush2.msra.mxu0 0.0
    %178 = vmatprep.subr.mxu0 0.0
    %179 = vmatpush2.msra.mxu0 0.0
    %180 = vmatprep.subr.mxu0 0.0
    %181 = vmatpush2.msra.mxu0 0.0
    %182 = vmatprep.subr.mxu0 0.0
    %183 = vmatpush2.msra.mxu0 0.0
    %184 = vmatprep.mubr.f32.mxu0 0.0
    %185 = vmatmul.mubr.f32.gmra.mxu0 %v108
    %v186 = vpop.f32.mrf.mxu0
    %v187 = vadd.f32 %v113, %v186
    %v188 = vpop.f32.mrf.mxu0
    %v189 = vadd.f32 %v117, %v188
    %190 = vdwg.mxu0
    %vm191 = vcmp.ge.f32.partialorder %v187, 0.0
    %vm192 = vcmp.ge.f32.partialorder %v189, 0.0
    %v193 = vmul.f32 %v187, 0.2
    %v194 = vmul.f32 %v189, 0.2
    %v195 = vsel %vm191, %v187, %v193
    %v196 = vsel %vm192, %v189, %v194
    %v197 = vrot.slane %v195, 4
    %v198 = vadd.f32 %v195, %v197
    %v199 = vrot.slane %v198, 2
    %v200 = vadd.f32 %v198, %v199
    %v201 = vrot.slane %v200, 1
    %v202 = vadd.f32 %v200, %v201
    %v203 = vrot.slane %v196, 4
    %v204 = vadd.f32 %v196, %v203
    %v205 = vrot.slane %v204, 2
    %v206 = vadd.f32 %v204, %v205
    %v207 = vrot.slane %v206, 1
    %v208 = vadd.f32 %v206, %v207
    %v209 = vmul.f32 %v202, 0.125
    %v210 = vmul.f32 %v208, 0.125
    %v211 = vmul.f32 %v195, %v195
    %v212 = vmul.f32 %v196, %v196
    %v213 = vrot.slane %v211, 4
    %v214 = vadd.f32 %v211, %v213
    %v215 = vrot.slane %v214, 2
    %v216 = vadd.f32 %v214, %v215
    %v217 = vrot.slane %v216, 1
    %v218 = vadd.f32 %v216, %v217
    %v219 = vrot.slane %v212, 4
    %v220 = vadd.f32 %v212, %v219
    %v221 = vrot.slane %v220, 2
    %v222 = vadd.f32 %v220, %v221
    %v223 = vrot.slane %v222, 1
    %v224 = vadd.f32 %v222, %v223
    %v225 = vmul.f32 %v218, 0.125
    %v226 = vmul.f32 %v224, 0.125
    %v227 = vmul.f32 %v209, %v209
    %v228 = vmul.f32 %v210, %v210
    %v229 = vsub.f32 %v225, %v227
    %v230 = vsub.f32 %v226, %v228
    %v231 = vmax.f32 %v229, 0.0
    %v232 = vmax.f32 %v230, 0.0
    %v233 = vadd.f32 %v231, 1e-05
    %v234 = vadd.f32 %v232, 1e-05
    %v235 = vrsqrt.pop %v233
    %v236 = vrsqrt.pop %v234
    %v239 = vcombine.low %v235, %v236
    %v241 = vunpack.c.l.s4 1966171168
    %v242 = vunpack.c.0.s8 %v241
    %v243 = vlaneseq
    %v244 = vshrl.u32 %v243, 7
    %v245 = vsub.s32 %v242, %v244
    %v246 = vrot.slane %v239, %v245
    %v248 = vunpack.c.l.s4 1966171168
    %v249 = vunpack.c.0.s8 %v248
    %v250 = vlaneseq
    %v251 = vshrl.u32 %v250, 7
    %v252 = vsub.s32 %v249, %v251
    %v253 = vrot.slane %v246, %v252
    %v255 = vmul.f32 %v105, %v253
    %v257 = vlaneseq
    %v258 = vshrl.u32 %v257, 7
    %v259 = vsub.s32 0, %v258
    %v260 = vrot.slane %v255, %v259
    %v261 = vlaneseq
    %v262 = vshrl.u32 %v261, 7
    %v263 = vsub.s32 1, %v262
    %v264 = vrot.slane %v255, %v263
    %v267 = vmul.f32 %v209, %v260
    %v268 = vmul.f32 %v210, %v264
    %v271 = vcombine.low %v267, %v268
    %v273 = vunpack.c.l.s4 1966171168
    %v274 = vunpack.c.0.s8 %v273
    %v275 = vlaneseq
    %v276 = vshrl.u32 %v275, 7
    %v277 = vsub.s32 %v274, %v276
    %v278 = vrot.slane %v271, %v277
    %v280 = vunpack.c.l.s4 1966171168
    %v281 = vunpack.c.0.s8 %v280
    %v282 = vlaneseq
    %v283 = vshrl.u32 %v282, 7
    %v284 = vsub.s32 %v281, %v283
    %v285 = vrot.slane %v278, %v284
    %v287 = vsub.f32 %v107, %v285
    %v288 = vmul.f32 %v195, %v260
    %v289 = vmul.f32 %v196, %v264
    %v291 = vlaneseq
    %v292 = vshrl.u32 %v291, 7
    %v293 = vsub.s32 0, %v292
    %v294 = vrot.slane %v287, %v293
    %v295 = vlaneseq
    %v296 = vshrl.u32 %v295, 7
    %v297 = vsub.s32 1, %v296
    %v298 = vrot.slane %v287, %v297
    %v301 = vadd.f32 %v288, %v294
    %v302 = vadd.f32 %v289, %v298
    %303 = vst [vmem:[#allocation2 + $0x8] sm:$0xff] %v301
    %304 = vst [vmem:[#allocation2 + $0x10] sm:$0xff] %v302
    %v305 = vld [vmem:[#allocation8 + $0x100] sm:$0xff]
    %v306 = vld [vmem:[#allocation8 + $0x108] sm:$0xff]
    %v307 = vld [vmem:[#allocation8 + $0x110] sm:$0xff]
    %v308 = vld [vmem:[#allocation8 + $0x118] sm:$0xff]
    %v309 = vld [vmem:[#allocation8 + $0x120] sm:$0xff]
    %v310 = vld [vmem:[#allocation8 + $0x128] sm:$0xff]
    %v311 = vld [vmem:[#allocation8 + $0x130] sm:$0xff]
    %v312 = vld [vmem:[#allocation8 + $0x138] sm:$0xff]
    %v313 = vld [vmem:[#allocation8 + $0x140] sm:$0xff]
    %v314 = vld [vmem:[#allocation8 + $0x148] sm:$0xff]
    %v315 = vld [vmem:[#allocation8 + $0x150] sm:$0xff]
    %v316 = vld [vmem:[#allocation8 + $0x158] sm:$0xff]
    %v317 = vld [vmem:[#allocation8 + $0x160] sm:$0xff]
    %v318 = vld [vmem:[#allocation8 + $0x168] sm:$0xff]
    %v319 = vld [vmem:[#allocation8 + $0x170] sm:$0xff]
    %v320 = vld [vmem:[#allocation8 + $0x178] sm:$0xff]
    %v321 = vld [vmem:[#allocation8 + $0x180] sm:$0xff]
    %v322 = vld [vmem:[#allocation8 + $0x188] sm:$0xff]
    %v323 = vld [vmem:[#allocation8 + $0x190] sm:$0xff]
    %v324 = vld [vmem:[#allocation8 + $0x198] sm:$0xff]
    %v325 = vld [vmem:[#allocation8 + $0x1a0] sm:$0xff]
    %v326 = vld [vmem:[#allocation8 + $0x1a8] sm:$0xff]
    %v327 = vld [vmem:[#allocation8 + $0x1b0] sm:$0xff]
    %v328 = vld [vmem:[#allocation8 + $0x1b8] sm:$0xff]
    %v329 = vld [vmem:[#allocation8 + $0x1c0] sm:$0xff]
    %v330 = vld [vmem:[#allocation8 + $0x1c8] sm:$0xff]
    %v331 = vld [vmem:[#allocation8 + $0x1d0] sm:$0xff]
    %v332 = vld [vmem:[#allocation8 + $0x1d8] sm:$0xff]
    %v333 = vld [vmem:[#allocation8 + $0x1e0] sm:$0xff]
    %v334 = vld [vmem:[#allocation8 + $0x1e8] sm:$0xff]
    %v335 = vld [vmem:[#allocation8 + $0x1f0] sm:$0xff]
    %v336 = vld [vmem:[#allocation8 + $0x1f8] sm:$0xff]
    %v337 = vld [vmem:[#allocation8 + $0x200] sm:$0xff]
    %v338 = vld [vmem:[#allocation8 + $0x208] sm:$0xff]
    %v339 = vld [vmem:[#allocation8 + $0x210] sm:$0xff]
    %v340 = vld [vmem:[#allocation8 + $0x218] sm:$0xff]
    %v341 = vld [vmem:[#allocation8 + $0x220] sm:$0xff]
    %v342 = vld [vmem:[#allocation8 + $0x228] sm:$0xff]
    %v343 = vld [vmem:[#allocation8 + $0x230] sm:$0xff]
    %v344 = vld [vmem:[#allocation8 + $0x238] sm:$0xff]
    %v345 = vld [vmem:[#allocation8 + $0x240] sm:$0xff]
    %v346 = vld [vmem:[#allocation8 + $0x248] sm:$0xff]
    %v347 = vld [vmem:[#allocation8 + $0x250] sm:$0xff]
    %v348 = vld [vmem:[#allocation8 + $0x258] sm:$0xff]
    %v349 = vld [vmem:[#allocation8 + $0x260] sm:$0xff]
    %v350 = vld [vmem:[#allocation8 + $0x268] sm:$0xff]
    %v351 = vld [vmem:[#allocation8 + $0x270] sm:$0xff]
    %v352 = vld [vmem:[#allocation8 + $0x278] sm:$0xff]
    %v353 = vld [vmem:[#allocation8 + $0x280] sm:$0xff]
    %v354 = vld [vmem:[#allocation8 + $0x288] sm:$0xff]
    %v355 = vld [vmem:[#allocation8 + $0x290] sm:$0xff]
    %v356 = vld [vmem:[#allocation8 + $0x298] sm:$0xff]
    %v357 = vld [vmem:[#allocation8 + $0x2a0] sm:$0xff]
    %v358 = vld [vmem:[#allocation8 + $0x2a8] sm:$0xff]
    %v359 = vld [vmem:[#allocation8 + $0x2b0] sm:$0xff]
    %v360 = vld [vmem:[#allocation8 + $0x2b8] sm:$0xff]
    %v361 = vld [vmem:[#allocation8 + $0x2c0] sm:$0xff]
    %v362 = vld [vmem:[#allocation8 + $0x2c8] sm:$0xff]
    %v363 = vld [vmem:[#allocation8 + $0x2d0] sm:$0xff]
    %v364 = vld [vmem:[#allocation8 + $0x2d8] sm:$0xff]
    %v365 = vld [vmem:[#allocation8 + $0x2e0] sm:$0xff]
    %v366 = vld [vmem:[#allocation8 + $0x2e8] sm:$0xff]
    %v367 = vld [vmem:[#allocation8 + $0x2f0] sm:$0xff]
    %v368 = vld [vmem:[#allocation8 + $0x2f8] sm:$0xff]
    %v369 = vld [vmem:[#allocation8 + $0x300] sm:$0xff]
    %v370 = vld [vmem:[#allocation8 + $0x308] sm:$0xff]
    %v371 = vld [vmem:[#allocation8 + $0x310] sm:$0xff]
    %v372 = vld [vmem:[#allocation8 + $0x318] sm:$0xff]
    %v373 = vld [vmem:[#allocation8 + $0x320] sm:$0xff]
    %v374 = vld [vmem:[#allocation8 + $0x328] sm:$0xff]
    %v375 = vld [vmem:[#allocation8 + $0x330] sm:$0xff]
    %v376 = vld [vmem:[#allocation8 + $0x338] sm:$0xff]
    %v377 = vld [vmem:[#allocation8 + $0x340] sm:$0xff]
    %v378 = vld [vmem:[#allocation8 + $0x348] sm:$0xff]
    %v379 = vld [vmem:[#allocation8 + $0x350] sm:$0xff]
    %v380 = vld [vmem:[#allocation8 + $0x358] sm:$0xff]
    %v381 = vld [vmem:[#allocation8 + $0x360] sm:$0xff]
    %v382 = vld [vmem:[#allocation8 + $0x368] sm:$0xff]
    %v383 = vld [vmem:[#allocation8 + $0x370] sm:$0xff]
    %v384 = vld [vmem:[#allocation8 + $0x378] sm:$0xff]
    %v385 = vld [vmem:[#allocation8 + $0x380] sm:$0xff]
    %v386 = vld [vmem:[#allocation8 + $0x388] sm:$0xff]
    %v387 = vld [vmem:[#allocation8 + $0x390] sm:$0xff]
    %v388 = vld [vmem:[#allocation8 + $0x398] sm:$0xff]
    %v389 = vld [vmem:[#allocation8 + $0x3a0] sm:$0xff]
    %v390 = vld [vmem:[#allocation8 + $0x3a8] sm:$0xff]
    %v391 = vld [vmem:[#allocation8 + $0x3b0] sm:$0xff]
    %v392 = vld [vmem:[#allocation8 + $0x3b8] sm:$0xff]
    %v393 = vld [vmem:[#allocation8 + $0x3c0] sm:$0xff]
    %v394 = vld [vmem:[#allocation8 + $0x3c8] sm:$0xff]
    %v395 = vld [vmem:[#allocation8 + $0x3d0] sm:$0xff]
    %v396 = vld [vmem:[#allocation8 + $0x3d8] sm:$0xff]
    %v397 = vld [vmem:[#allocation8 + $0x3e0] sm:$0xff]
    %v398 = vld [vmem:[#allocation8 + $0x3e8] sm:$0xff]
    %v399 = vld [vmem:[#allocation8 + $0x3f0] sm:$0xff]
    %v400 = vld [vmem:[#allocation8 + $0x3f8] sm:$0xff]
    %s401 = scalar_lea.vmem [#allocation9], 3
    %v402 = vld [vmem:[%s401] ss:$8 sm:$0x3]
    %s403 = scalar_lea.vmem [#allocation9], 4
    %v404 = vld [vmem:[%s403] ss:$8 sm:$0x3]
    %s405 = scalar_lea.vmem [#allocation9], 5
    %v406 = vld [vmem:[%s405] ss:$8 sm:$0x3]
    %v407 = vld [vmem:[#allocation2] sm:$0xff]
    %v408 = vld [vmem:[#allocation2 + $0x8] sm:$0xff]
    %v409 = vld [vmem:[#allocation2 + $0x10] sm:$0xff]
    %v411 = vlaneseq
    %v412 = vshrl.u32 %v411, 7
    %v413 = vsub.s32 0, %v412
    %v414 = vrot.slane %v402, %v413
    %v415 = vlaneseq
    %v416 = vshrl.u32 %v415, 7
    %v417 = vsub.s32 1, %v416
    %v418 = vrot.slane %v402, %v417
    %421 = vmatprep.subr.mxu0 %v336
    %422 = vmatpush1.msra.mxu0 %v335
    %423 = vmatprep.subr.mxu0 %v334
    %424 = vmatpush1.msra.mxu0 %v333
    %425 = vmatprep.subr.mxu0 %v332
    %426 = vmatpush1.msra.mxu0 %v331
    %427 = vmatprep.subr.mxu0 %v330
    %428 = vmatpush1.msra.mxu0 %v329
    %429 = vmatprep.subr.mxu0 %v328
    %430 = vmatpush1.msra.mxu0 %v327
    %431 = vmatprep.subr.mxu0 %v326
    %432 = vmatpush1.msra.mxu0 %v325
    %433 = vmatprep.subr.mxu0 %v324
    %434 = vmatpush1.msra.mxu0 %v323
    %435 = vmatprep.subr.mxu0 %v322
    %436 = vmatpush1.msra.mxu0 %v321
    %437 = vmatprep.subr.mxu0 %v320
    %438 = vmatpush1.msra.mxu0 %v319
    %439 = vmatprep.subr.mxu0 %v318
    %440 = vmatpush1.msra.mxu0 %v317
    %441 = vmatprep.subr.mxu0 %v316
    %442 = vmatpush1.msra.mxu0 %v315
    %443 = vmatprep.subr.mxu0 %v314
    %444 = vmatpush1.msra.mxu0 %v313
    %445 = vmatprep.subr.mxu0 %v312
    %446 = vmatpush1.msra.mxu0 %v311
    %447 = vmatprep.subr.mxu0 %v310
    %448 = vmatpush1.msra.mxu0 %v309
    %449 = vmatprep.subr.mxu0 %v308
    %450 = vmatpush1.msra.mxu0 %v307
    %451 = vmatprep.subr.mxu0 %v306
    %452 = vmatpush1.msra.mxu0 %v305
    %453 = vmatprep.subr.mxu0 %v368
    %454 = vmatpush2.msra.mxu0 %v367
    %455 = vmatprep.subr.mxu0 %v366
    %456 = vmatpush2.msra.mxu0 %v365
    %457 = vmatprep.subr.mxu0 %v364
    %458 = vmatpush2.msra.mxu0 %v363
    %459 = vmatprep.subr.mxu0 %v362
    %460 = vmatpush2.msra.mxu0 %v361
    %461 = vmatprep.subr.mxu0 %v360
    %462 = vmatpush2.msra.mxu0 %v359
    %463 = vmatprep.subr.mxu0 %v358
    %464 = vmatpush2.msra.mxu0 %v357
    %465 = vmatprep.subr.mxu0 %v356
    %466 = vmatpush2.msra.mxu0 %v355
    %467 = vmatprep.subr.mxu0 %v354
    %468 = vmatpush2.msra.mxu0 %v353
    %469 = vmatprep.subr.mxu0 %v352
    %470 = vmatpush2.msra.mxu0 %v351
    %471 = vmatprep.subr.mxu0 %v350
    %472 = vmatpush2.msra.mxu0 %v349
    %473 = vmatprep.subr.mxu0 %v348
    %474 = vmatpush2.msra.mxu0 %v347
    %475 = vmatprep.subr.mxu0 %v346
    %476 = vmatpush2.msra.mxu0 %v345
    %477 = vmatprep.subr.mxu0 %v344
    %478 = vmatpush2.msra.mxu0 %v343
    %479 = vmatprep.subr.mxu0 %v342
    %480 = vmatpush2.msra.mxu0 %v341
    %481 = vmatprep.subr.mxu0 %v340
    %482 = vmatpush2.msra.mxu0 %v339
    %483 = vmatprep.subr.mxu0 %v338
    %484 = vmatpush2.msra.mxu0 %v337
    %485 = vmatprep.mubr.f32.mxu0 %v408
    %486 = vmatmul.mubr.f32.gmra.mxu0 %v407
    %v487 = vpop.f32.mrf.mxu0
    %v488 = vadd.f32 %v414, %v487
    %v489 = vpop.f32.mrf.mxu0
    %v490 = vadd.f32 %v418, %v489
    %491 = vdwg.mxu0
    %492 = vmatprep.subr.mxu0 %v400
    %493 = vmatpush1.msra.mxu0 %v399
    %494 = vmatprep.subr.mxu0 %v398
    %495 = vmatpush1.msra.mxu0 %v397
    %496 = vmatprep.subr.mxu0 %v396
    %497 = vmatpush1.msra.mxu0 %v395
    %498 = vmatprep.subr.mxu0 %v394
    %499 = vmatpush1.msra.mxu0 %v393
    %500 = vmatprep.subr.mxu0 %v392
    %501 = vmatpush1.msra.mxu0 %v391
    %502 = vmatprep.subr.mxu0 %v390
    %503 = vmatpush1.msra.mxu0 %v389
    %504 = vmatprep.subr.mxu0 %v388
    %505 = vmatpush1.msra.mxu0 %v387
    %506 = vmatprep.subr.mxu0 %v386
    %507 = vmatpush1.msra.mxu0 %v385
    %508 = vmatprep.subr.mxu0 %v384
    %509 = vmatpush1.msra.mxu0 %v383
    %510 = vmatprep.subr.mxu0 %v382
    %511 = vmatpush1.msra.mxu0 %v381
    %512 = vmatprep.subr.mxu0 %v380
    %513 = vmatpush1.msra.mxu0 %v379
    %514 = vmatprep.subr.mxu0 %v378
    %515 = vmatpush1.msra.mxu0 %v377
    %516 = vmatprep.subr.mxu0 %v376
    %517 = vmatpush1.msra.mxu0 %v375
    %518 = vmatprep.subr.mxu0 %v374
    %519 = vmatpush1.msra.mxu0 %v373
    %520 = vmatprep.subr.mxu0 %v372
    %521 = vmatpush1.msra.mxu0 %v371
    %522 = vmatprep.subr.mxu0 %v370
    %523 = vmatpush1.msra.mxu0 %v369
    %524 = vmatprep.subr.mxu0 0.0
    %525 = vmatpush2.msra.mxu0 0.0
    %526 = vmatprep.subr.mxu0 0.0
    %527 = vmatpush2.msra.mxu0 0.0
    %528 = vmatprep.subr.mxu0 0.0
    %529 = vmatpush2.msra.mxu0 0.0
    %530 = vmatprep.subr.mxu0 0.0
    %531 = vmatpush2.msra.mxu0 0.0
    %532 = vmatprep.subr.mxu0 0.0
    %533 = vmatpush2.msra.mxu0 0.0
    %534 = vmatprep.subr.mxu0 0.0
    %535 = vmatpush2.msra.mxu0 0.0
    %536 = vmatprep.subr.mxu0 0.0
    %537 = vmatpush2.msra.mxu0 0.0
    %538 = vmatprep.subr.mxu0 0.0
    %539 = vmatpush2.msra.mxu0 0.0
    %540 = vmatprep.subr.mxu0 0.0
    %541 = vmatpush2.msra.mxu0 0.0
    %542 = vmatprep.subr.mxu0 0.0
    %543 = vmatpush2.msra.mxu0 0.0
    %544 = vmatprep.subr.mxu0 0.0
    %545 = vmatpush2.msra.mxu0 0.0
    %546 = vmatprep.subr.mxu0 0.0
    %547 = vmatpush2.msra.mxu0 0.0
    %548 = vmatprep.subr.mxu0 0.0
    %549 = vmatpush2.msra.mxu0 0.0
    %550 = vmatprep.subr.mxu0 0.0
    %551 = vmatpush2.msra.mxu0 0.0
    %552 = vmatprep.subr.mxu0 0.0
    %553 = vmatpush2.msra.mxu0 0.0
    %554 = vmatprep.subr.mxu0 0.0
    %555 = vmatpush2.msra.mxu0 0.0
    %556 = vmatprep.mubr.f32.mxu0 0.0
    %557 = vmatmul.mubr.f32.gmra.mxu0 %v409
    %v558 = vpop.f32.mrf.mxu0
    %v559 = vadd.f32 %v488, %v558
    %v560 = vpop.f32.mrf.mxu0
    %v561 = vadd.f32 %v490, %v560
    %562 = vdwg.mxu0
    %vm563 = vcmp.ge.f32.partialorder %v559, 0.0
    %vm564 = vcmp.ge.f32.partialorder %v561, 0.0
    %v565 = vmul.f32 %v559, 0.2
    %v566 = vmul.f32 %v561, 0.2
    %v567 = vsel %vm563, %v559, %v565
    %v568 = vsel %vm564, %v561, %v566
    %v569 = vrot.slane %v567, 4
    %v570 = vadd.f32 %v567, %v569
    %v571 = vrot.slane %v570, 2
    %v572 = vadd.f32 %v570, %v571
    %v573 = vrot.slane %v572, 1
    %v574 = vadd.f32 %v572, %v573
    %v575 = vrot.slane %v568, 4
    %v576 = vadd.f32 %v568, %v575
    %v577 = vrot.slane %v576, 2
    %v578 = vadd.f32 %v576, %v577
    %v579 = vrot.slane %v578, 1
    %v580 = vadd.f32 %v578, %v579
    %v581 = vmul.f32 %v574, 0.125
    %v582 = vmul.f32 %v580, 0.125
    %v583 = vmul.f32 %v567, %v567
    %v584 = vmul.f32 %v568, %v568
    %v585 = vrot.slane %v583, 4
    %v586 = vadd.f32 %v583, %v585
    %v587 = vrot.slane %v586, 2
    %v588 = vadd.f32 %v586, %v587
    %v589 = vrot.slane %v588, 1
    %v590 = vadd.f32 %v588, %v589
    %v591 = vrot.slane %v584, 4
    %v592 = vadd.f32 %v584, %v591
    %v593 = vrot.slane %v592, 2
    %v594 = vadd.f32 %v592, %v593
    %v595 = vrot.slane %v594, 1
    %v596 = vadd.f32 %v594, %v595
    %v597 = vmul.f32 %v590, 0.125
    %v598 = vmul.f32 %v596, 0.125
    %v599 = vmul.f32 %v581, %v581
    %v600 = vmul.f32 %v582, %v582
    %v601 = vsub.f32 %v597, %v599
    %v602 = vsub.f32 %v598, %v600
    %v603 = vmax.f32 %v601, 0.0
    %v604 = vmax.f32 %v602, 0.0
    %v605 = vadd.f32 %v603, 1e-05
    %v606 = vadd.f32 %v604, 1e-05
    %v607 = vrsqrt.pop %v605
    %v608 = vrsqrt.pop %v606
    %v611 = vcombine.low %v607, %v608
    %v613 = vunpack.c.l.s4 1966171168
    %v614 = vunpack.c.0.s8 %v613
    %v615 = vlaneseq
    %v616 = vshrl.u32 %v615, 7
    %v617 = vsub.s32 %v614, %v616
    %v618 = vrot.slane %v611, %v617
    %v620 = vunpack.c.l.s4 1966171168
    %v621 = vunpack.c.0.s8 %v620
    %v622 = vlaneseq
    %v623 = vshrl.u32 %v622, 7
    %v624 = vsub.s32 %v621, %v623
    %v625 = vrot.slane %v618, %v624
    %v627 = vmul.f32 %v404, %v625
    %v629 = vlaneseq
    %v630 = vshrl.u32 %v629, 7
    %v631 = vsub.s32 0, %v630
    %v632 = vrot.slane %v627, %v631
    %v633 = vlaneseq
    %v634 = vshrl.u32 %v633, 7
    %v635 = vsub.s32 1, %v634
    %v636 = vrot.slane %v627, %v635
    %v639 = vmul.f32 %v581, %v632
    %v640 = vmul.f32 %v582, %v636
    %v643 = vcombine.low %v639, %v640
    %v645 = vunpack.c.l.s4 1966171168
    %v646 = vunpack.c.0.s8 %v645
    %v647 = vlaneseq
    %v648 = vshrl.u32 %v647, 7
    %v649 = vsub.s32 %v646, %v648
    %v650 = vrot.slane %v643, %v649
    %v652 = vunpack.c.l.s4 1966171168
    %v653 = vunpack.c.0.s8 %v652
    %v654 = vlaneseq
    %v655 = vshrl.u32 %v654, 7
    %v656 = vsub.s32 %v653, %v655
    %v657 = vrot.slane %v650, %v656
    %v659 = vsub.f32 %v406, %v657
    %v660 = vmul.f32 %v567, %v632
    %v661 = vmul.f32 %v568, %v636
    %v663 = vlaneseq
    %v664 = vshrl.u32 %v663, 7
    %v665 = vsub.s32 0, %v664
    %v666 = vrot.slane %v659, %v665
    %v667 = vlaneseq
    %v668 = vshrl.u32 %v667, 7
    %v669 = vsub.s32 1, %v668
    %v670 = vrot.slane %v659, %v669
    %v673 = vadd.f32 %v660, %v666
    %v674 = vadd.f32 %v661, %v670
    %675 = vst [vmem:[#allocation2 + $0x18] sm:$0xff] %v673
    %676 = vst [vmem:[#allocation2 + $0x20] sm:$0xff] %v674
    %v677 = vld [vmem:[#allocation8 + $0x400] sm:$0xff]
    %v678 = vld [vmem:[#allocation8 + $0x408] sm:$0xff]
    %v679 = vld [vmem:[#allocation8 + $0x410] sm:$0xff]
    %v680 = vld [vmem:[#allocation8 + $0x418] sm:$0xff]
    %v681 = vld [vmem:[#allocation8 + $0x420] sm:$0xff]
    %v682 = vld [vmem:[#allocation8 + $0x428] sm:$0xff]
    %v683 = vld [vmem:[#allocation8 + $0x430] sm:$0xff]
    %v684 = vld [vmem:[#allocation8 + $0x438] sm:$0xff]
    %v685 = vld [vmem:[#allocation8 + $0x440] sm:$0xff]
    %v686 = vld [vmem:[#allocation8 + $0x448] sm:$0xff]
    %v687 = vld [vmem:[#allocation8 + $0x450] sm:$0xff]
    %v688 = vld [vmem:[#allocation8 + $0x458] sm:$0xff]
    %v689 = vld [vmem:[#allocation8 + $0x460] sm:$0xff]
    %v690 = vld [vmem:[#allocation8 + $0x468] sm:$0xff]
    %v691 = vld [vmem:[#allocation8 + $0x470] sm:$0xff]
    %v692 = vld [vmem:[#allocation8 + $0x478] sm:$0xff]
    %v693 = vld [vmem:[#allocation8 + $0x480] sm:$0xff]
    %v694 = vld [vmem:[#allocation8 + $0x488] sm:$0xff]
    %v695 = vld [vmem:[#allocation8 + $0x490] sm:$0xff]
    %v696 = vld [vmem:[#allocation8 + $0x498] sm:$0xff]
    %v697 = vld [vmem:[#allocation8 + $0x4a0] sm:$0xff]
    %v698 = vld [vmem:[#allocation8 + $0x4a8] sm:$0xff]
    %v699 = vld [vmem:[#allocation8 + $0x4b0] sm:$0xff]
    %v700 = vld [vmem:[#allocation8 + $0x4b8] sm:$0xff]
    %v701 = vld [vmem:[#allocation8 + $0x4c0] sm:$0xff]
    %v702 = vld [vmem:[#allocation8 + $0x4c8] sm:$0xff]
    %v703 = vld [vmem:[#allocation8 + $0x4d0] sm:$0xff]
    %v704 = vld [vmem:[#allocation8 + $0x4d8] sm:$0xff]
    %v705 = vld [vmem:[#allocation8 + $0x4e0] sm:$0xff]
    %v706 = vld [vmem:[#allocation8 + $0x4e8] sm:$0xff]
    %v707 = vld [vmem:[#allocation8 + $0x4f0] sm:$0xff]
    %v708 = vld [vmem:[#allocation8 + $0x4f8] sm:$0xff]
    %v709 = vld [vmem:[#allocation8 + $0x500] sm:$0xff]
    %v710 = vld [vmem:[#allocation8 + $0x508] sm:$0xff]
    %v711 = vld [vmem:[#allocation8 + $0x510] sm:$0xff]
    %v712 = vld [vmem:[#allocation8 + $0x518] sm:$0xff]
    %v713 = vld [vmem:[#allocation8 + $0x520] sm:$0xff]
    %v714 = vld [vmem:[#allocation8 + $0x528] sm:$0xff]
    %v715 = vld [vmem:[#allocation8 + $0x530] sm:$0xff]
    %v716 = vld [vmem:[#allocation8 + $0x538] sm:$0xff]
    %v717 = vld [vmem:[#allocation8 + $0x540] sm:$0xff]
    %v718 = vld [vmem:[#allocation8 + $0x548] sm:$0xff]
    %v719 = vld [vmem:[#allocation8 + $0x550] sm:$0xff]
    %v720 = vld [vmem:[#allocation8 + $0x558] sm:$0xff]
    %v721 = vld [vmem:[#allocation8 + $0x560] sm:$0xff]
    %v722 = vld [vmem:[#allocation8 + $0x568] sm:$0xff]
    %v723 = vld [vmem:[#allocation8 + $0x570] sm:$0xff]
    %v724 = vld [vmem:[#allocation8 + $0x578] sm:$0xff]
    %v725 = vld [vmem:[#allocation8 + $0x580] sm:$0xff]
    %v726 = vld [vmem:[#allocation8 + $0x588] sm:$0xff]
    %v727 = vld [vmem:[#allocation8 + $0x590] sm:$0xff]
    %v728 = vld [vmem:[#allocation8 + $0x598] sm:$0xff]
    %v729 = vld [vmem:[#allocation8 + $0x5a0] sm:$0xff]
    %v730 = vld [vmem:[#allocation8 + $0x5a8] sm:$0xff]
    %v731 = vld [vmem:[#allocation8 + $0x5b0] sm:$0xff]
    %v732 = vld [vmem:[#allocation8 + $0x5b8] sm:$0xff]
    %v733 = vld [vmem:[#allocation8 + $0x5c0] sm:$0xff]
    %v734 = vld [vmem:[#allocation8 + $0x5c8] sm:$0xff]
    %v735 = vld [vmem:[#allocation8 + $0x5d0] sm:$0xff]
    %v736 = vld [vmem:[#allocation8 + $0x5d8] sm:$0xff]
    %v737 = vld [vmem:[#allocation8 + $0x5e0] sm:$0xff]
    %v738 = vld [vmem:[#allocation8 + $0x5e8] sm:$0xff]
    %v739 = vld [vmem:[#allocation8 + $0x5f0] sm:$0xff]
    %v740 = vld [vmem:[#allocation8 + $0x5f8] sm:$0xff]
    %v741 = vld [vmem:[#allocation8 + $0x600] sm:$0xff]
    %v742 = vld [vmem:[#allocation8 + $0x608] sm:$0xff]
    %v743 = vld [vmem:[#allocation8 + $0x610] sm:$0xff]
    %v744 = vld [vmem:[#allocation8 + $0x618] sm:$0xff]
    %v745 = vld [vmem:[#allocation8 + $0x620] sm:$0xff]
    %v746 = vld [vmem:[#allocation8 + $0x628] sm:$0xff]
    %v747 = vld [vmem:[#allocation8 + $0x630] sm:$0xff]
    %v748 = vld [vmem:[#allocation8 + $0x638] sm:$0xff]
    %v749 = vld [vmem:[#allocation8 + $0x640] sm:$0xff]
    %v750 = vld [vmem:[#allocation8 + $0x648] sm:$0xff]
    %v751 = vld [vmem:[#allocation8 + $0x650] sm:$0xff]
    %v752 = vld [vmem:[#allocation8 + $0x658] sm:$0xff]
    %v753 = vld [vmem:[#allocation8 + $0x660] sm:$0xff]
    %v754 = vld [vmem:[#allocation8 + $0x668] sm:$0xff]
    %v755 = vld [vmem:[#allocation8 + $0x670] sm:$0xff]
    %v756 = vld [vmem:[#allocation8 + $0x678] sm:$0xff]
    %v757 = vld [vmem:[#allocation8 + $0x680] sm:$0xff]
    %v758 = vld [vmem:[#allocation8 + $0x688] sm:$0xff]
    %v759 = vld [vmem:[#allocation8 + $0x690] sm:$0xff]
    %v760 = vld [vmem:[#allocation8 + $0x698] sm:$0xff]
    %v761 = vld [vmem:[#allocation8 + $0x6a0] sm:$0xff]
    %v762 = vld [vmem:[#allocation8 + $0x6a8] sm:$0xff]
    %v763 = vld [vmem:[#allocation8 + $0x6b0] sm:$0xff]
    %v764 = vld [vmem:[#allocation8 + $0x6b8] sm:$0xff]
    %v765 = vld [vmem:[#allocation8 + $0x6c0] sm:$0xff]
    %v766 = vld [vmem:[#allocation8 + $0x6c8] sm:$0xff]
    %v767 = vld [vmem:[#allocation8 + $0x6d0] sm:$0xff]
    %v768 = vld [vmem:[#allocation8 + $0x6d8] sm:$0xff]
    %v769 = vld [vmem:[#allocation8 + $0x6e0] sm:$0xff]
    %v770 = vld [vmem:[#allocation8 + $0x6e8] sm:$0xff]
    %v771 = vld [vmem:[#allocation8 + $0x6f0] sm:$0xff]
    %v772 = vld [vmem:[#allocation8 + $0x6f8] sm:$0xff]
    %v773 = vld [vmem:[#allocation8 + $0x700] sm:$0xff]
    %v774 = vld [vmem:[#allocation8 + $0x708] sm:$0xff]
    %v775 = vld [vmem:[#allocation8 + $0x710] sm:$0xff]
    %v776 = vld [vmem:[#allocation8 + $0x718] sm:$0xff]
    %v777 = vld [vmem:[#allocation8 + $0x720] sm:$0xff]
    %v778 = vld [vmem:[#allocation8 + $0x728] sm:$0xff]
    %v779 = vld [vmem:[#allocation8 + $0x730] sm:$0xff]
    %v780 = vld [vmem:[#allocation8 + $0x738] sm:$0xff]
    %v781 = vld [vmem:[#allocation8 + $0x740] sm:$0xff]
    %v782 = vld [vmem:[#allocation8 + $0x748] sm:$0xff]
    %v783 = vld [vmem:[#allocation8 + $0x750] sm:$0xff]
    %v784 = vld [vmem:[#allocation8 + $0x758] sm:$0xff]
    %v785 = vld [vmem:[#allocation8 + $0x760] sm:$0xff]
    %v786 = vld [vmem:[#allocation8 + $0x768] sm:$0xff]
    %v787 = vld [vmem:[#allocation8 + $0x770] sm:$0xff]
    %v788 = vld [vmem:[#allocation8 + $0x778] sm:$0xff]
    %v789 = vld [vmem:[#allocation8 + $0x780] sm:$0xff]
    %v790 = vld [vmem:[#allocation8 + $0x788] sm:$0xff]
    %v791 = vld [vmem:[#allocation8 + $0x790] sm:$0xff]
    %v792 = vld [vmem:[#allocation8 + $0x798] sm:$0xff]
    %v793 = vld [vmem:[#allocation8 + $0x7a0] sm:$0xff]
    %v794 = vld [vmem:[#allocation8 + $0x7a8] sm:$0xff]
    %v795 = vld [vmem:[#allocation8 + $0x7b0] sm:$0xff]
    %v796 = vld [vmem:[#allocation8 + $0x7b8] sm:$0xff]
    %v797 = vld [vmem:[#allocation8 + $0x7c0] sm:$0xff]
    %v798 = vld [vmem:[#allocation8 + $0x7c8] sm:$0xff]
    %v799 = vld [vmem:[#allocation8 + $0x7d0] sm:$0xff]
    %v800 = vld [vmem:[#allocation8 + $0x7d8] sm:$0xff]
    %v801 = vld [vmem:[#allocation8 + $0x7e0] sm:$0xff]
    %v802 = vld [vmem:[#allocation8 + $0x7e8] sm:$0xff]
    %v803 = vld [vmem:[#allocation8 + $0x7f0] sm:$0xff]
    %v804 = vld [vmem:[#allocation8 + $0x7f8] sm:$0xff]
    %v805 = vld [vmem:[#allocation8 + $0x800] sm:$0xff]
    %v806 = vld [vmem:[#allocation8 + $0x808] sm:$0xff]
    %v807 = vld [vmem:[#allocation8 + $0x810] sm:$0xff]
    %v808 = vld [vmem:[#allocation8 + $0x818] sm:$0xff]
    %v809 = vld [vmem:[#allocation8 + $0x820] sm:$0xff]
    %v810 = vld [vmem:[#allocation8 + $0x828] sm:$0xff]
    %v811 = vld [vmem:[#allocation8 + $0x830] sm:$0xff]
    %v812 = vld [vmem:[#allocation8 + $0x838] sm:$0xff]
    %v813 = vld [vmem:[#allocation8 + $0x840] sm:$0xff]
    %v814 = vld [vmem:[#allocation8 + $0x848] sm:$0xff]
    %v815 = vld [vmem:[#allocation8 + $0x850] sm:$0xff]
    %v816 = vld [vmem:[#allocation8 + $0x858] sm:$0xff]
    %v817 = vld [vmem:[#allocation8 + $0x860] sm:$0xff]
    %v818 = vld [vmem:[#allocation8 + $0x868] sm:$0xff]
    %v819 = vld [vmem:[#allocation8 + $0x870] sm:$0xff]
    %v820 = vld [vmem:[#allocation8 + $0x878] sm:$0xff]
    %v821 = vld [vmem:[#allocation8 + $0x880] sm:$0xff]
    %v822 = vld [vmem:[#allocation8 + $0x888] sm:$0xff]
    %v823 = vld [vmem:[#allocation8 + $0x890] sm:$0xff]
    %v824 = vld [vmem:[#allocation8 + $0x898] sm:$0xff]
    %v825 = vld [vmem:[#allocation8 + $0x8a0] sm:$0xff]
    %v826 = vld [vmem:[#allocation8 + $0x8a8] sm:$0xff]
    %v827 = vld [vmem:[#allocation8 + $0x8b0] sm:$0xff]
    %v828 = vld [vmem:[#allocation8 + $0x8b8] sm:$0xff]
    %v829 = vld [vmem:[#allocation8 + $0x8c0] sm:$0xff]
    %v830 = vld [vmem:[#allocation8 + $0x8c8] sm:$0xff]
    %v831 = vld [vmem:[#allocation8 + $0x8d0] sm:$0xff]
    %v832 = vld [vmem:[#allocation8 + $0x8d8] sm:$0xff]
    %v833 = vld [vmem:[#allocation8 + $0x8e0] sm:$0xff]
    %v834 = vld [vmem:[#allocation8 + $0x8e8] sm:$0xff]
    %v835 = vld [vmem:[#allocation8 + $0x8f0] sm:$0xff]
    %v836 = vld [vmem:[#allocation8 + $0x8f8] sm:$0xff]
    %s837 = scalar_lea.vmem [#allocation9], 6
    %v838 = vld [vmem:[%s837] ss:$8 sm:$0x3]
    %s839 = scalar_lea.vmem [#allocation9], 7
    %v840 = vld [vmem:[%s839] ss:$8 sm:$0x3]
    %s841 = scalar_lea.vmem [#allocation9], 16
    %v842 = vld [vmem:[%s841] ss:$8 sm:$0x3]
    %v843 = vld [vmem:[#allocation2] sm:$0xff]
    %v844 = vld [vmem:[#allocation2 + $0x8] sm:$0xff]
    %v845 = vld [vmem:[#allocation2 + $0x10] sm:$0xff]
    %v846 = vld [vmem:[#allocation2 + $0x18] sm:$0xff]
    %v847 = vld [vmem:[#allocation2 + $0x20] sm:$0xff]
    %v849 = vlaneseq
    %v850 = vshrl.u32 %v849, 7
    %v851 = vsub.s32 0, %v850
    %v852 = vrot.slane %v838, %v851
    %v853 = vlaneseq
    %v854 = vshrl.u32 %v853, 7
    %v855 = vsub.s32 1, %v854
    %v856 = vrot.slane %v838, %v855
    %859 = vmatprep.subr.mxu0 %v708
    %860 = vmatpush1.msra.mxu0 %v707
    %861 = vmatprep.subr.mxu0 %v706
    %862 = vmatpush1.msra.mxu0 %v705
    %863 = vmatprep.subr.mxu0 %v704
    %864 = vmatpush1.msra.mxu0 %v703
    %865 = vmatprep.subr.mxu0 %v702
    %866 = vmatpush1.msra.mxu0 %v701
    %867 = vmatprep.subr.mxu0 %v700
    %868 = vmatpush1.msra.mxu0 %v699
    %869 = vmatprep.subr.mxu0 %v698
    %870 = vmatpush1.msra.mxu0 %v697
    %871 = vmatprep.subr.mxu0 %v696
    %872 = vmatpush1.msra.mxu0 %v695
    %873 = vmatprep.subr.mxu0 %v694
    %874 = vmatpush1.msra.mxu0 %v693
    %875 = vmatprep.subr.mxu0 %v692
    %876 = vmatpush1.msra.mxu0 %v691
    %877 = vmatprep.subr.mxu0 %v690
    %878 = vmatpush1.msra.mxu0 %v689
    %879 = vmatprep.subr.mxu0 %v688
    %880 = vmatpush1.msra.mxu0 %v687
    %881 = vmatprep.subr.mxu0 %v686
    %882 = vmatpush1.msra.mxu0 %v685
    %883 = vmatprep.subr.mxu0 %v684
    %884 = vmatpush1.msra.mxu0 %v683
    %885 = vmatprep.subr.mxu0 %v682
    %886 = vmatpush1.msra.mxu0 %v681
    %887 = vmatprep.subr.mxu0 %v680
    %888 = vmatpush1.msra.mxu0 %v679
    %889 = vmatprep.subr.mxu0 %v678
    %890 = vmatpush1.msra.mxu0 %v677
    %891 = vmatprep.subr.mxu0 %v740
    %892 = vmatpush2.msra.mxu0 %v739
    %893 = vmatprep.subr.mxu0 %v738
    %894 = vmatpush2.msra.mxu0 %v737
    %895 = vmatprep.subr.mxu0 %v736
    %896 = vmatpush2.msra.mxu0 %v735
    %897 = vmatprep.subr.mxu0 %v734
    %898 = vmatpush2.msra.mxu0 %v733
    %899 = vmatprep.subr.mxu0 %v732
    %900 = vmatpush2.msra.mxu0 %v731
    %901 = vmatprep.subr.mxu0 %v730
    %902 = vmatpush2.msra.mxu0 %v729
    %903 = vmatprep.subr.mxu0 %v728
    %904 = vmatpush2.msra.mxu0 %v727
    %905 = vmatprep.subr.mxu0 %v726
    %906 = vmatpush2.msra.mxu0 %v725
    %907 = vmatprep.subr.mxu0 %v724
    %908 = vmatpush2.msra.mxu0 %v723
    %909 = vmatprep.subr.mxu0 %v722
    %910 = vmatpush2.msra.mxu0 %v721
    %911 = vmatprep.subr.mxu0 %v720
    %912 = vmatpush2.msra.mxu0 %v719
    %913 = vmatprep.subr.mxu0 %v718
    %914 = vmatpush2.msra.mxu0 %v717
    %915 = vmatprep.subr.mxu0 %v716
    %916 = vmatpush2.msra.mxu0 %v715
    %917 = vmatprep.subr.mxu0 %v714
    %918 = vmatpush2.msra.mxu0 %v713
    %919 = vmatprep.subr.mxu0 %v712
    %920 = vmatpush2.msra.mxu0 %v711
    %921 = vmatprep.subr.mxu0 %v710
    %922 = vmatpush2.msra.mxu0 %v709
    %923 = vmatprep.mubr.f32.mxu0 %v844
    %924 = vmatmul.mubr.f32.gmra.mxu0 %v843
    %v925 = vpop.f32.mrf.mxu0
    %v926 = vadd.f32 %v852, %v925
    %v927 = vpop.f32.mrf.mxu0
    %v928 = vadd.f32 %v856, %v927
    %929 = vdwg.mxu0
    %930 = vmatprep.subr.mxu0 %v772
    %931 = vmatpush1.msra.mxu0 %v771
    %932 = vmatprep.subr.mxu0 %v770
    %933 = vmatpush1.msra.mxu0 %v769
    %934 = vmatprep.subr.mxu0 %v768
    %935 = vmatpush1.msra.mxu0 %v767
    %936 = vmatprep.subr.mxu0 %v766
    %937 = vmatpush1.msra.mxu0 %v765
    %938 = vmatprep.subr.mxu0 %v764
    %939 = vmatpush1.msra.mxu0 %v763
    %940 = vmatprep.subr.mxu0 %v762
    %941 = vmatpush1.msra.mxu0 %v761
    %942 = vmatprep.subr.mxu0 %v760
    %943 = vmatpush1.msra.mxu0 %v759
    %944 = vmatprep.subr.mxu0 %v758
    %945 = vmatpush1.msra.mxu0 %v757
    %946 = vmatprep.subr.mxu0 %v756
    %947 = vmatpush1.msra.mxu0 %v755
    %948 = vmatprep.subr.mxu0 %v754
    %949 = vmatpush1.msra.mxu0 %v753
    %950 = vmatprep.subr.mxu0 %v752
    %951 = vmatpush1.msra.mxu0 %v751
    %952 = vmatprep.subr.mxu0 %v750
    %953 = vmatpush1.msra.mxu0 %v749
    %954 = vmatprep.subr.mxu0 %v748
    %955 = vmatpush1.msra.mxu0 %v747
    %956 = vmatprep.subr.mxu0 %v746
    %957 = vmatpush1.msra.mxu0 %v745
    %958 = vmatprep.subr.mxu0 %v744
    %959 = vmatpush1.msra.mxu0 %v743
    %960 = vmatprep.subr.mxu0 %v742
    %961 = vmatpush1.msra.mxu0 %v741
    %962 = vmatprep.subr.mxu0 %v804
    %963 = vmatpush2.msra.mxu0 %v803
    %964 = vmatprep.subr.mxu0 %v802
    %965 = vmatpush2.msra.mxu0 %v801
    %966 = vmatprep.subr.mxu0 %v800
    %967 = vmatpush2.msra.mxu0 %v799
    %968 = vmatprep.subr.mxu0 %v798
    %969 = vmatpush2.msra.mxu0 %v797
    %970 = vmatprep.subr.mxu0 %v796
    %971 = vmatpush2.msra.mxu0 %v795
    %972 = vmatprep.subr.mxu0 %v794
    %973 = vmatpush2.msra.mxu0 %v793
    %974 = vmatprep.subr.mxu0 %v792
    %975 = vmatpush2.msra.mxu0 %v791
    %976 = vmatprep.subr.mxu0 %v790
    %977 = vmatpush2.msra.mxu0 %v789
    %978 = vmatprep.subr.mxu0 %v788
    %979 = vmatpush2.msra.mxu0 %v787
    %980 = vmatprep.subr.mxu0 %v786
    %981 = vmatpush2.msra.mxu0 %v785
    %982 = vmatprep.subr.mxu0 %v784
    %983 = vmatpush2.msra.mxu0 %v783
    %984 = vmatprep.subr.mxu0 %v782
    %985 = vmatpush2.msra.mxu0 %v781
    %986 = vmatprep.subr.mxu0 %v780
    %987 = vmatpush2.msra.mxu0 %v779
    %988 = vmatprep.subr.mxu0 %v778
    %989 = vmatpush2.msra.mxu0 %v777
    %990 = vmatprep.subr.mxu0 %v776
    %991 = vmatpush2.msra.mxu0 %v775
    %992 = vmatprep.subr.mxu0 %v774
    %993 = vmatpush2.msra.mxu0 %v773
    %994 = vmatprep.mubr.f32.mxu0 %v846
    %995 = vmatmul.mubr.f32.gmra.mxu0 %v845
    %v996 = vpop.f32.mrf.mxu0
    %v997 = vadd.f32 %v926, %v996
    %v998 = vpop.f32.mrf.mxu0
    %v999 = vadd.f32 %v928, %v998
    %1000 = vdwg.mxu0
    %1001 = vmatprep.subr.mxu0 %v836
    %1002 = vmatpush1.msra.mxu0 %v835
    %1003 = vmatprep.subr.mxu0 %v834
    %1004 = vmatpush1.msra.mxu0 %v833
    %1005 = vmatprep.subr.mxu0 %v832
    %1006 = vmatpush1.msra.mxu0 %v831
    %1007 = vmatprep.subr.mxu0 %v830
    %1008 = vmatpush1.msra.mxu0 %v829
    %1009 = vmatprep.subr.mxu0 %v828
    %1010 = vmatpush1.msra.mxu0 %v827
    %1011 = vmatprep.subr.mxu0 %v826
    %1012 = vmatpush1.msra.mxu0 %v825
    %1013 = vmatprep.subr.mxu0 %v824
    %1014 = vmatpush1.msra.mxu0 %v823
    %1015 = vmatprep.subr.mxu0 %v822
    %1016 = vmatpush1.msra.mxu0 %v821
    %1017 = vmatprep.subr.mxu0 %v820
    %1018 = vmatpush1.msra.mxu0 %v819
    %1019 = vmatprep.subr.mxu0 %v818
    %1020 = vmatpush1.msra.mxu0 %v817
    %1021 = vmatprep.subr.mxu0 %v816
    %1022 = vmatpush1.msra.mxu0 %v815
    %1023 = vmatprep.subr.mxu0 %v814
    %1024 = vmatpush1.msra.mxu0 %v813
    %1025 = vmatprep.subr.mxu0 %v812
    %1026 = vmatpush1.msra.mxu0 %v811
    %1027 = vmatprep.subr.mxu0 %v810
    %1028 = vmatpush1.msra.mxu0 %v809
    %1029 = vmatprep.subr.mxu0 %v808
    %1030 = vmatpush1.msra.mxu0 %v807
    %1031 = vmatprep.subr.mxu0 %v806
    %1032 = vmatpush1.msra.mxu0 %v805
    %1033 = vmatprep.subr.mxu0 0.0
    %1034 = vmatpush2.msra.mxu0 0.0
    %1035 = vmatprep.subr.mxu0 0.0
    %1036 = vmatpush2.msra.mxu0 0.0
    %1037 = vmatprep.subr.mxu0 0.0
    %1038 = vmatpush2.msra.mxu0 0.0
    %1039 = vmatprep.subr.mxu0 0.0
    %1040 = vmatpush2.msra.mxu0 0.0
    %1041 = vmatprep.subr.mxu0 0.0
    %1042 = vmatpush2.msra.mxu0 0.0
    %1043 = vmatprep.subr.mxu0 0.0
    %1044 = vmatpush2.msra.mxu0 0.0
    %1045 = vmatprep.subr.mxu0 0.0
    %1046 = vmatpush2.msra.mxu0 0.0
    %1047 = vmatprep.subr.mxu0 0.0
    %1048 = vmatpush2.msra.mxu0 0.0
    %1049 = vmatprep.subr.mxu0 0.0
    %1050 = vmatpush2.msra.mxu0 0.0
    %1051 = vmatprep.subr.mxu0 0.0
    %1052 = vmatpush2.msra.mxu0 0.0
    %1053 = vmatprep.subr.mxu0 0.0
    %1054 = vmatpush2.msra.mxu0 0.0
    %1055 = vmatprep.subr.mxu0 0.0
    %1056 = vmatpush2.msra.mxu0 0.0
    %1057 = vmatprep.subr.mxu0 0.0
    %1058 = vmatpush2.msra.mxu0 0.0
    %1059 = vmatprep.subr.mxu0 0.0
    %1060 = vmatpush2.msra.mxu0 0.0
    %1061 = vmatprep.subr.mxu0 0.0
    %1062 = vmatpush2.msra.mxu0 0.0
    %1063 = vmatprep.subr.mxu0 0.0
    %1064 = vmatpush2.msra.mxu0 0.0
    %1065 = vmatprep.mubr.f32.mxu0 0.0
    %1066 = vmatmul.mubr.f32.gmra.mxu0 %v847
    %v1067 = vpop.f32.mrf.mxu0
    %v1068 = vadd.f32 %v997, %v1067
    %v1069 = vpop.f32.mrf.mxu0
    %v1070 = vadd.f32 %v999, %v1069
    %1071 = vdwg.mxu0
    %vm1072 = vcmp.ge.f32.partialorder %v1068, 0.0
    %vm1073 = vcmp.ge.f32.partialorder %v1070, 0.0
    %v1074 = vmul.f32 %v1068, 0.2
    %v1075 = vmul.f32 %v1070, 0.2
    %v1076 = vsel %vm1072, %v1068, %v1074
    %v1077 = vsel %vm1073, %v1070, %v1075
    %v1078 = vrot.slane %v1076, 4
    %v1079 = vadd.f32 %v1076, %v1078
    %v1080 = vrot.slane %v1079, 2
    %v1081 = vadd.f32 %v1079, %v1080
    %v1082 = vrot.slane %v1081, 1
    %v1083 = vadd.f32 %v1081, %v1082
    %v1084 = vrot.slane %v1077, 4
    %v1085 = vadd.f32 %v1077, %v1084
    %v1086 = vrot.slane %v1085, 2
    %v1087 = vadd.f32 %v1085, %v1086
    %v1088 = vrot.slane %v1087, 1
    %v1089 = vadd.f32 %v1087, %v1088
    %v1090 = vmul.f32 %v1083, 0.125
    %v1091 = vmul.f32 %v1089, 0.125
    %v1092 = vmul.f32 %v1076, %v1076
    %v1093 = vmul.f32 %v1077, %v1077
    %v1094 = vrot.slane %v1092, 4
    %v1095 = vadd.f32 %v1092, %v1094
    %v1096 = vrot.slane %v1095, 2
    %v1097 = vadd.f32 %v1095, %v1096
    %v1098 = vrot.slane %v1097, 1
    %v1099 = vadd.f32 %v1097, %v1098
    %v1100 = vrot.slane %v1093, 4
    %v1101 = vadd.f32 %v1093, %v1100
    %v1102 = vrot.slane %v1101, 2
    %v1103 = vadd.f32 %v1101, %v1102
    %v1104 = vrot.slane %v1103, 1
    %v1105 = vadd.f32 %v1103, %v1104
    %v1106 = vmul.f32 %v1099, 0.125
    %v1107 = vmul.f32 %v1105, 0.125
    %v1108 = vmul.f32 %v1090, %v1090
    %v1109 = vmul.f32 %v1091, %v1091
    %v1110 = vsub.f32 %v1106, %v1108
    %v1111 = vsub.f32 %v1107, %v1109
    %v1112 = vmax.f32 %v1110, 0.0
    %v1113 = vmax.f32 %v1111, 0.0
    %v1114 = vadd.f32 %v1112, 1e-05
    %v1115 = vadd.f32 %v1113, 1e-05
    %v1116 = vrsqrt.pop %v1114
    %v1117 = vrsqrt.pop %v1115
    %v1120 = vcombine.low %v1116, %v1117
    %v1122 = vunpack.c.l.s4 1966171168
    %v1123 = vunpack.c.0.s8 %v1122
    %v1124 = vlaneseq
    %v1125 = vshrl.u32 %v1124, 7
    %v1126 = vsub.s32 %v1123, %v1125
    %v1127 = vrot.slane %v1120, %v1126
    %v1129 = vunpack.c.l.s4 1966171168
    %v1130 = vunpack.c.0.s8 %v1129
    %v1131 = vlaneseq
    %v1132 = vshrl.u32 %v1131, 7
    %v1133 = vsub.s32 %v1130, %v1132
    %v1134 = vrot.slane %v1127, %v1133
    %v1136 = vmul.f32 %v840, %v1134
    %v1138 = vlaneseq
    %v1139 = vshrl.u32 %v1138, 7
    %v1140 = vsub.s32 0, %v1139
    %v1141 = vrot.slane %v1136, %v1140
    %v1142 = vlaneseq
    %v1143 = vshrl.u32 %v1142, 7
    %v1144 = vsub.s32 1, %v1143
    %v1145 = vrot.slane %v1136, %v1144
    %v1148 = vmul.f32 %v1090, %v1141
    %v1149 = vmul.f32 %v1091, %v1145
    %v1152 = vcombine.low %v1148, %v1149
    %v1154 = vunpack.c.l.s4 1966171168
    %v1155 = vunpack.c.0.s8 %v1154
    %v1156 = vlaneseq
    %v1157 = vshrl.u32 %v1156, 7
    %v1158 = vsub.s32 %v1155, %v1157
    %v1159 = vrot.slane %v1152, %v1158
    %v1161 = vunpack.c.l.s4 1966171168
    %v1162 = vunpack.c.0.s8 %v1161
    %v1163 = vlaneseq
    %v1164 = vshrl.u32 %v1163, 7
    %v1165 = vsub.s32 %v1162, %v1164
    %v1166 = vrot.slane %v1159, %v1165
    %v1168 = vsub.f32 %v842, %v1166
    %v1169 = vmul.f32 %v1076, %v1141
    %v1170 = vmul.f32 %v1077, %v1145
    %v1172 = vlaneseq
    %v1173 = vshrl.u32 %v1172, 7
    %v1174 = vsub.s32 0, %v1173
    %v1175 = vrot.slane %v1168, %v1174
    %v1176 = vlaneseq
    %v1177 = vshrl.u32 %v1176, 7
    %v1178 = vsub.s32 1, %v1177
    %v1179 = vrot.slane %v1168, %v1178
    %v1182 = vadd.f32 %v1169, %v1175
    %v1183 = vadd.f32 %v1170, %v1179
    %1184 = vst [vmem:[#allocation2 + $0x28] sm:$0xff] %v1182
    %1185 = vst [vmem:[#allocation2 + $0x30] sm:$0xff] %v1183
    %v1186 = vld [vmem:[#allocation8 + $0x900] sm:$0xff]
    %v1187 = vld [vmem:[#allocation8 + $0x910] sm:$0xff]
    %v1188 = vld [vmem:[#allocation8 + $0x920] sm:$0xff]
    %v1189 = vld [vmem:[#allocation8 + $0x930] sm:$0xff]
    %v1190 = vld [vmem:[#allocation8 + $0x940] sm:$0xff]
    %v1191 = vld [vmem:[#allocation8 + $0x950] sm:$0xff]
    %v1192 = vld [vmem:[#allocation8 + $0x960] sm:$0xff]
    %v1193 = vld [vmem:[#allocation8 + $0x970] sm:$0xff]
    %v1194 = vld [vmem:[#allocation8 + $0x980] sm:$0xff]
    %v1195 = vld [vmem:[#allocation8 + $0x990] sm:$0xff]
    %v1196 = vld [vmem:[#allocation8 + $0x9a0] sm:$0xff]
    %v1197 = vld [vmem:[#allocation8 + $0x9b0] sm:$0xff]
    %v1198 = vld [vmem:[#allocation8 + $0x9c0] sm:$0xff]
    %v1199 = vld [vmem:[#allocation8 + $0x9d0] sm:$0xff]
    %v1200 = vld [vmem:[#allocation8 + $0x9e0] sm:$0xff]
    %v1201 = vld [vmem:[#allocation8 + $0x9f0] sm:$0xff]
    %v1202 = vld [vmem:[#allocation8 + $0xa00] sm:$0xff]
    %v1203 = vld [vmem:[#allocation8 + $0xa10] sm:$0xff]
    %v1204 = vld [vmem:[#allocation8 + $0xa20] sm:$0xff]
    %v1205 = vld [vmem:[#allocation8 + $0xa30] sm:$0xff]
    %v1206 = vld [vmem:[#allocation8 + $0xa40] sm:$0xff]
    %v1207 = vld [vmem:[#allocation8 + $0xa50] sm:$0xff]
    %v1208 = vld [vmem:[#allocation8 + $0xa60] sm:$0xff]
    %v1209 = vld [vmem:[#allocation8 + $0xa70] sm:$0xff]
    %v1210 = vld [vmem:[#allocation8 + $0xa80] sm:$0xff]
    %v1211 = vld [vmem:[#allocation8 + $0xa90] sm:$0xff]
    %v1212 = vld [vmem:[#allocation8 + $0xaa0] sm:$0xff]
    %v1213 = vld [vmem:[#allocation8 + $0xab0] sm:$0xff]
    %v1214 = vld [vmem:[#allocation8 + $0xac0] sm:$0xff]
    %v1215 = vld [vmem:[#allocation8 + $0xad0] sm:$0xff]
    %v1216 = vld [vmem:[#allocation8 + $0xae0] sm:$0xff]
    %v1217 = vld [vmem:[#allocation8 + $0xaf0] sm:$0xff]
    %v1218 = vld [vmem:[#allocation8 + $0xb00] sm:$0xff]
    %v1219 = vld [vmem:[#allocation8 + $0xb10] sm:$0xff]
    %v1220 = vld [vmem:[#allocation8 + $0xb20] sm:$0xff]
    %v1221 = vld [vmem:[#allocation8 + $0xb30] sm:$0xff]
    %v1222 = vld [vmem:[#allocation8 + $0xb40] sm:$0xff]
    %v1223 = vld [vmem:[#allocation8 + $0xb50] sm:$0xff]
    %v1224 = vld [vmem:[#allocation8 + $0xb60] sm:$0xff]
    %v1225 = vld [vmem:[#allocation8 + $0xb70] sm:$0xff]
    %v1226 = vld [vmem:[#allocation8 + $0xb80] sm:$0xff]
    %v1227 = vld [vmem:[#allocation8 + $0xb90] sm:$0xff]
    %v1228 = vld [vmem:[#allocation8 + $0xba0] sm:$0xff]
    %v1229 = vld [vmem:[#allocation8 + $0xbb0] sm:$0xff]
    %v1230 = vld [vmem:[#allocation8 + $0xbc0] sm:$0xff]
    %v1231 = vld [vmem:[#allocation8 + $0xbd0] sm:$0xff]
    %v1232 = vld [vmem:[#allocation8 + $0xbe0] sm:$0xff]
    %v1233 = vld [vmem:[#allocation8 + $0xbf0] sm:$0xff]
    %v1234 = vld [vmem:[#allocation8 + $0xc00] sm:$0xff]
    %v1235 = vld [vmem:[#allocation8 + $0xc10] sm:$0xff]
    %v1236 = vld [vmem:[#allocation8 + $0xc20] sm:$0xff]
    %v1237 = vld [vmem:[#allocation8 + $0xc30] sm:$0xff]
    %v1238 = vld [vmem:[#allocation8 + $0xc40] sm:$0xff]
    %v1239 = vld [vmem:[#allocation8 + $0xc50] sm:$0xff]
    %v1240 = vld [vmem:[#allocation8 + $0xc60] sm:$0xff]
    %v1241 = vld [vmem:[#allocation8 + $0xc70] sm:$0xff]
    %v1242 = vld [vmem:[#allocation8 + $0xc80] sm:$0xff]
    %v1243 = vld [vmem:[#allocation8 + $0xc90] sm:$0xff]
    %v1244 = vld [vmem:[#allocation8 + $0xca0] sm:$0xff]
    %v1245 = vld [vmem:[#allocation8 + $0xcb0] sm:$0xff]
    %v1246 = vld [vmem:[#allocation8 + $0xcc0] sm:$0xff]
    %v1247 = vld [vmem:[#allocation8 + $0xcd0] sm:$0xff]
    %v1248 = vld [vmem:[#allocation8 + $0xce0] sm:$0xff]
    %v1249 = vld [vmem:[#allocation8 + $0xcf0] sm:$0xff]
    %v1250 = vld [vmem:[#allocation8 + $0xd00] sm:$0xff]
    %v1251 = vld [vmem:[#allocation8 + $0xd10] sm:$0xff]
    %v1252 = vld [vmem:[#allocation8 + $0xd20] sm:$0xff]
    %v1253 = vld [vmem:[#allocation8 + $0xd30] sm:$0xff]
    %v1254 = vld [vmem:[#allocation8 + $0xd40] sm:$0xff]
    %v1255 = vld [vmem:[#allocation8 + $0xd50] sm:$0xff]
    %v1256 = vld [vmem:[#allocation8 + $0xd60] sm:$0xff]
    %v1257 = vld [vmem:[#allocation8 + $0xd70] sm:$0xff]
    %v1258 = vld [vmem:[#allocation8 + $0xd80] sm:$0xff]
    %v1259 = vld [vmem:[#allocation8 + $0xd90] sm:$0xff]
    %v1260 = vld [vmem:[#allocation8 + $0xda0] sm:$0xff]
    %v1261 = vld [vmem:[#allocation8 + $0xdb0] sm:$0xff]
    %v1262 = vld [vmem:[#allocation8 + $0xdc0] sm:$0xff]
    %v1263 = vld [vmem:[#allocation8 + $0xdd0] sm:$0xff]
    %v1264 = vld [vmem:[#allocation8 + $0xde0] sm:$0xff]
    %v1265 = vld [vmem:[#allocation8 + $0xdf0] sm:$0xff]
    %v1266 = vld [vmem:[#allocation8 + $0xe00] sm:$0xff]
    %v1267 = vld [vmem:[#allocation8 + $0xe10] sm:$0xff]
    %v1268 = vld [vmem:[#allocation8 + $0xe20] sm:$0xff]
    %v1269 = vld [vmem:[#allocation8 + $0xe30] sm:$0xff]
    %v1270 = vld [vmem:[#allocation8 + $0xe40] sm:$0xff]
    %v1271 = vld [vmem:[#allocation8 + $0xe50] sm:$0xff]
    %v1272 = vld [vmem:[#allocation8 + $0xe60] sm:$0xff]
    %v1273 = vld [vmem:[#allocation8 + $0xe70] sm:$0xff]
    %v1274 = vld [vmem:[#allocation8 + $0xe80] sm:$0xff]
    %v1275 = vld [vmem:[#allocation8 + $0xe90] sm:$0xff]
    %v1276 = vld [vmem:[#allocation8 + $0xea0] sm:$0xff]
    %v1277 = vld [vmem:[#allocation8 + $0xeb0] sm:$0xff]
    %v1278 = vld [vmem:[#allocation8 + $0xec0] sm:$0xff]
    %v1279 = vld [vmem:[#allocation8 + $0xed0] sm:$0xff]
    %v1280 = vld [vmem:[#allocation8 + $0xee0] sm:$0xff]
    %v1281 = vld [vmem:[#allocation8 + $0xef0] sm:$0xff]
    %v1282 = vld [vmem:[#allocation8 + $0xf00] sm:$0xff]
    %v1283 = vld [vmem:[#allocation8 + $0xf10] sm:$0xff]
    %v1284 = vld [vmem:[#allocation8 + $0xf20] sm:$0xff]
    %v1285 = vld [vmem:[#allocation8 + $0xf30] sm:$0xff]
    %v1286 = vld [vmem:[#allocation8 + $0xf40] sm:$0xff]
    %v1287 = vld [vmem:[#allocation8 + $0xf50] sm:$0xff]
    %v1288 = vld [vmem:[#allocation8 + $0xf60] sm:$0xff]
    %v1289 = vld [vmem:[#allocation8 + $0xf70] sm:$0xff]
    %v1290 = vld [vmem:[#allocation8 + $0xf80] sm:$0xff]
    %v1291 = vld [vmem:[#allocation8 + $0xf90] sm:$0xff]
    %v1292 = vld [vmem:[#allocation8 + $0xfa0] sm:$0xff]
    %v1293 = vld [vmem:[#allocation8 + $0xfb0] sm:$0xff]
    %v1294 = vld [vmem:[#allocation8 + $0xfc0] sm:$0xff]
    %v1295 = vld [vmem:[#allocation8 + $0xfd0] sm:$0xff]
    %v1296 = vld [vmem:[#allocation8 + $0xfe0] sm:$0xff]
    %v1297 = vld [vmem:[#allocation8 + $0xff0] sm:$0xff]
    %v1298 = vld [vmem:[#allocation9 + $0x11] ss:$0 sm:$0xff]
    %v1299 = vld [vmem:[#allocation9 + $0x12] ss:$0 sm:$0xff]
    %v1300 = vld [vmem:[#allocation9 + $0x13] ss:$0 sm:$0xff]
    %v1301 = vld [vmem:[#allocation2] sm:$0xff]
    %v1302 = vld [vmem:[#allocation2 + $0x8] sm:$0xff]
    %v1303 = vld [vmem:[#allocation2 + $0x10] sm:$0xff]
    %v1304 = vld [vmem:[#allocation2 + $0x18] sm:$0xff]
    %v1305 = vld [vmem:[#allocation2 + $0x20] sm:$0xff]
    %v1306 = vld [vmem:[#allocation2 + $0x28] sm:$0xff]
    %v1307 = vld [vmem:[#allocation2 + $0x30] sm:$0xff]
    %1308 = vmatprep.subr.mxu0 0.0
    %1309 = vmatpush1.msra.mxu0 %v1201
    %1310 = vmatprep.subr.mxu0 0.0
    %1311 = vmatpush1.msra.mxu0 %v1200
    %1312 = vmatprep.subr.mxu0 0.0
    %1313 = vmatpush1.msra.mxu0 %v1199
    %1314 = vmatprep.subr.mxu0 0.0
    %1315 = vmatpush1.msra.mxu0 %v1198
    %1316 = vmatprep.subr.mxu0 0.0
    %1317 = vmatpush1.msra.mxu0 %v1197
    %1318 = vmatprep.subr.mxu0 0.0
    %1319 = vmatpush1.msra.mxu0 %v1196
    %1320 = vmatprep.subr.mxu0 0.0
    %1321 = vmatpush1.msra.mxu0 %v1195
    %1322 = vmatprep.subr.mxu0 0.0
    %1323 = vmatpush1.msra.mxu0 %v1194
    %1324 = vmatprep.subr.mxu0 0.0
    %1325 = vmatpush1.msra.mxu0 %v1193
    %1326 = vmatprep.subr.mxu0 0.0
    %1327 = vmatpush1.msra.mxu0 %v1192
    %1328 = vmatprep.subr.mxu0 0.0
    %1329 = vmatpush1.msra.mxu0 %v1191
    %1330 = vmatprep.subr.mxu0 0.0
    %1331 = vmatpush1.msra.mxu0 %v1190
    %1332 = vmatprep.subr.mxu0 0.0
    %1333 = vmatpush1.msra.mxu0 %v1189
    %1334 = vmatprep.subr.mxu0 0.0
    %1335 = vmatpush1.msra.mxu0 %v1188
    %1336 = vmatprep.subr.mxu0 0.0
    %1337 = vmatpush1.msra.mxu0 %v1187
    %1338 = vmatprep.subr.mxu0 0.0
    %1339 = vmatpush1.msra.mxu0 %v1186
    %1340 = vmatprep.subr.mxu0 0.0
    %1341 = vmatpush2.msra.mxu0 %v1217
    %1342 = vmatprep.subr.mxu0 0.0
    %1343 = vmatpush2.msra.mxu0 %v1216
    %1344 = vmatprep.subr.mxu0 0.0
    %1345 = vmatpush2.msra.mxu0 %v1215
    %1346 = vmatprep.subr.mxu0 0.0
    %1347 = vmatpush2.msra.mxu0 %v1214
    %1348 = vmatprep.subr.mxu0 0.0
    %1349 = vmatpush2.msra.mxu0 %v1213
    %1350 = vmatprep.subr.mxu0 0.0
    %1351 = vmatpush2.msra.mxu0 %v1212
    %1352 = vmatprep.subr.mxu0 0.0
    %1353 = vmatpush2.msra.mxu0 %v1211
    %1354 = vmatprep.subr.mxu0 0.0
    %1355 = vmatpush2.msra.mxu0 %v1210
    %1356 = vmatprep.subr.mxu0 0.0
    %1357 = vmatpush2.msra.mxu0 %v1209
    %1358 = vmatprep.subr.mxu0 0.0
    %1359 = vmatpush2.msra.mxu0 %v1208
    %1360 = vmatprep.subr.mxu0 0.0
    %1361 = vmatpush2.msra.mxu0 %v1207
    %1362 = vmatprep.subr.mxu0 0.0
    %1363 = vmatpush2.msra.mxu0 %v1206
    %1364 = vmatprep.subr.mxu0 0.0
    %1365 = vmatpush2.msra.mxu0 %v1205
    %1366 = vmatprep.subr.mxu0 0.0
    %1367 = vmatpush2.msra.mxu0 %v1204
    %1368 = vmatprep.subr.mxu0 0.0
    %1369 = vmatpush2.msra.mxu0 %v1203
    %1370 = vmatprep.subr.mxu0 0.0
    %1371 = vmatpush2.msra.mxu0 %v1202
    %1372 = vmatprep.mubr.f32.mxu0 %v1302
    %1373 = vmatmul.mubr.f32.gmra.mxu0 %v1301
    %v1374 = vpop.f32.mrf.mxu0
    %v1375 = vadd.f32 %v1298, %v1374
    %v1376 = vpop.f32.mrf.mxu0
    %1377 = vdwg.mxu0
    %1378 = vmatprep.subr.mxu0 0.0
    %1379 = vmatpush1.msra.mxu0 %v1233
    %1380 = vmatprep.subr.mxu0 0.0
    %1381 = vmatpush1.msra.mxu0 %v1232
    %1382 = vmatprep.subr.mxu0 0.0
    %1383 = vmatpush1.msra.mxu0 %v1231
    %1384 = vmatprep.subr.mxu0 0.0
    %1385 = vmatpush1.msra.mxu0 %v1230
    %1386 = vmatprep.subr.mxu0 0.0
    %1387 = vmatpush1.msra.mxu0 %v1229
    %1388 = vmatprep.subr.mxu0 0.0
    %1389 = vmatpush1.msra.mxu0 %v1228
    %1390 = vmatprep.subr.mxu0 0.0
    %1391 = vmatpush1.msra.mxu0 %v1227
    %1392 = vmatprep.subr.mxu0 0.0
    %1393 = vmatpush1.msra.mxu0 %v1226
    %1394 = vmatprep.subr.mxu0 0.0
    %1395 = vmatpush1.msra.mxu0 %v1225
    %1396 = vmatprep.subr.mxu0 0.0
    %1397 = vmatpush1.msra.mxu0 %v1224
    %1398 = vmatprep.subr.mxu0 0.0
    %1399 = vmatpush1.msra.mxu0 %v1223
    %1400 = vmatprep.subr.mxu0 0.0
    %1401 = vmatpush1.msra.mxu0 %v1222
    %1402 = vmatprep.subr.mxu0 0.0
    %1403 = vmatpush1.msra.mxu0 %v1221
    %1404 = vmatprep.subr.mxu0 0.0
    %1405 = vmatpush1.msra.mxu0 %v1220
    %1406 = vmatprep.subr.mxu0 0.0
    %1407 = vmatpush1.msra.mxu0 %v1219
    %1408 = vmatprep.subr.mxu0 0.0
    %1409 = vmatpush1.msra.mxu0 %v1218
    %1410 = vmatprep.subr.mxu0 0.0
    %1411 = vmatpush2.msra.mxu0 %v1249
    %1412 = vmatprep.subr.mxu0 0.0
    %1413 = vmatpush2.msra.mxu0 %v1248
    %1414 = vmatprep.subr.mxu0 0.0
    %1415 = vmatpush2.msra.mxu0 %v1247
    %1416 = vmatprep.subr.mxu0 0.0
    %1417 = vmatpush2.msra.mxu0 %v1246
    %1418 = vmatprep.subr.mxu0 0.0
    %1419 = vmatpush2.msra.mxu0 %v1245
    %1420 = vmatprep.subr.mxu0 0.0
    %1421 = vmatpush2.msra.mxu0 %v1244
    %1422 = vmatprep.subr.mxu0 0.0
    %1423 = vmatpush2.msra.mxu0 %v1243
    %1424 = vmatprep.subr.mxu0 0.0
    %1425 = vmatpush2.msra.mxu0 %v1242
    %1426 = vmatprep.subr.mxu0 0.0
    %1427 = vmatpush2.msra.mxu0 %v1241
    %1428 = vmatprep.subr.mxu0 0.0
    %1429 = vmatpush2.msra.mxu0 %v1240
    %1430 = vmatprep.subr.mxu0 0.0
    %1431 = vmatpush2.msra.mxu0 %v1239
    %1432 = vmatprep.subr.mxu0 0.0
    %1433 = vmatpush2.msra.mxu0 %v1238
    %1434 = vmatprep.subr.mxu0 0.0
    %1435 = vmatpush2.msra.mxu0 %v1237
    %1436 = vmatprep.subr.mxu0 0.0
    %1437 = vmatpush2.msra.mxu0 %v1236
    %1438 = vmatprep.subr.mxu0 0.0
    %1439 = vmatpush2.msra.mxu0 %v1235
    %1440 = vmatprep.subr.mxu0 0.0
    %1441 = vmatpush2.msra.mxu0 %v1234
    %1442 = vmatprep.mubr.f32.mxu0 %v1304
    %1443 = vmatmul.mubr.f32.gmra.mxu0 %v1303
    %v1444 = vpop.f32.mrf.mxu0
    %v1445 = vadd.f32 %v1375, %v1444
    %v1446 = vpop.f32.mrf.mxu0
    %1447 = vdwg.mxu0
    %1448 = vmatprep.subr.mxu0 0.0
    %1449 = vmatpush1.msra.mxu0 %v1265
    %1450 = vmatprep.subr.mxu0 0.0
    %1451 = vmatpush1.msra.mxu0 %v1264
    %1452 = vmatprep.subr.mxu0 0.0
    %1453 = vmatpush1.msra.mxu0 %v1263
    %1454 = vmatprep.subr.mxu0 0.0
    %1455 = vmatpush1.msra.mxu0 %v1262
    %1456 = vmatprep.subr.mxu0 0.0
    %1457 = vmatpush1.msra.mxu0 %v1261
    %1458 = vmatprep.subr.mxu0 0.0
    %1459 = vmatpush1.msra.mxu0 %v1260
    %1460 = vmatprep.subr.mxu0 0.0
    %1461 = vmatpush1.msra.mxu0 %v1259
    %1462 = vmatprep.subr.mxu0 0.0
    %1463 = vmatpush1.msra.mxu0 %v1258
    %1464 = vmatprep.subr.mxu0 0.0
    %1465 = vmatpush1.msra.mxu0 %v1257
    %1466 = vmatprep.subr.mxu0 0.0
    %1467 = vmatpush1.msra.mxu0 %v1256
    %1468 = vmatprep.subr.mxu0 0.0
    %1469 = vmatpush1.msra.mxu0 %v1255
    %1470 = vmatprep.subr.mxu0 0.0
    %1471 = vmatpush1.msra.mxu0 %v1254
    %1472 = vmatprep.subr.mxu0 0.0
    %1473 = vmatpush1.msra.mxu0 %v1253
    %1474 = vmatprep.subr.mxu0 0.0
    %1475 = vmatpush1.msra.mxu0 %v1252
    %1476 = vmatprep.subr.mxu0 0.0
    %1477 = vmatpush1.msra.mxu0 %v1251
    %1478 = vmatprep.subr.mxu0 0.0
    %1479 = vmatpush1.msra.mxu0 %v1250
    %1480 = vmatprep.subr.mxu0 0.0
    %1481 = vmatpush2.msra.mxu0 %v1281
    %1482 = vmatprep.subr.mxu0 0.0
    %1483 = vmatpush2.msra.mxu0 %v1280
    %1484 = vmatprep.subr.mxu0 0.0
    %1485 = vmatpush2.msra.mxu0 %v1279
    %1486 = vmatprep.subr.mxu0 0.0
    %1487 = vmatpush2.msra.mxu0 %v1278
    %1488 = vmatprep.subr.mxu0 0.0
    %1489 = vmatpush2.msra.mxu0 %v1277
    %1490 = vmatprep.subr.mxu0 0.0
    %1491 = vmatpush2.msra.mxu0 %v1276
    %1492 = vmatprep.subr.mxu0 0.0
    %1493 = vmatpush2.msra.mxu0 %v1275
    %1494 = vmatprep.subr.mxu0 0.0
    %1495 = vmatpush2.msra.mxu0 %v1274
    %1496 = vmatprep.subr.mxu0 0.0
    %1497 = vmatpush2.msra.mxu0 %v1273
    %1498 = vmatprep.subr.mxu0 0.0
    %1499 = vmatpush2.msra.mxu0 %v1272
    %1500 = vmatprep.subr.mxu0 0.0
    %1501 = vmatpush2.msra.mxu0 %v1271
    %1502 = vmatprep.subr.mxu0 0.0
    %1503 = vmatpush2.msra.mxu0 %v1270
    %1504 = vmatprep.subr.mxu0 0.0
    %1505 = vmatpush2.msra.mxu0 %v1269
    %1506 = vmatprep.subr.mxu0 0.0
    %1507 = vmatpush2.msra.mxu0 %v1268
    %1508 = vmatprep.subr.mxu0 0.0
    %1509 = vmatpush2.msra.mxu0 %v1267
    %1510 = vmatprep.subr.mxu0 0.0
    %1511 = vmatpush2.msra.mxu0 %v1266
    %1512 = vmatprep.mubr.f32.mxu0 %v1306
    %1513 = vmatmul.mubr.f32.gmra.mxu0 %v1305
    %v1514 = vpop.f32.mrf.mxu0
    %v1515 = vadd.f32 %v1445, %v1514
    %v1516 = vpop.f32.mrf.mxu0
    %1517 = vdwg.mxu0
    %1518 = vmatprep.subr.mxu0 0.0
    %1519 = vmatpush1.msra.mxu0 %v1297
    %1520 = vmatprep.subr.mxu0 0.0
    %1521 = vmatpush1.msra.mxu0 %v1296
    %1522 = vmatprep.subr.mxu0 0.0
    %1523 = vmatpush1.msra.mxu0 %v1295
    %1524 = vmatprep.subr.mxu0 0.0
    %1525 = vmatpush1.msra.mxu0 %v1294
    %1526 = vmatprep.subr.mxu0 0.0
    %1527 = vmatpush1.msra.mxu0 %v1293
    %1528 = vmatprep.subr.mxu0 0.0
    %1529 = vmatpush1.msra.mxu0 %v1292
    %1530 = vmatprep.subr.mxu0 0.0
    %1531 = vmatpush1.msra.mxu0 %v1291
    %1532 = vmatprep.subr.mxu0 0.0
    %1533 = vmatpush1.msra.mxu0 %v1290
    %1534 = vmatprep.subr.mxu0 0.0
    %1535 = vmatpush1.msra.mxu0 %v1289
    %1536 = vmatprep.subr.mxu0 0.0
    %1537 = vmatpush1.msra.mxu0 %v1288
    %1538 = vmatprep.subr.mxu0 0.0
    %1539 = vmatpush1.msra.mxu0 %v1287
    %1540 = vmatprep.subr.mxu0 0.0
    %1541 = vmatpush1.msra.mxu0 %v1286
    %1542 = vmatprep.subr.mxu0 0.0
    %1543 = vmatpush1.msra.mxu0 %v1285
    %1544 = vmatprep.subr.mxu0 0.0
    %1545 = vmatpush1.msra.mxu0 %v1284
    %1546 = vmatprep.subr.mxu0 0.0
    %1547 = vmatpush1.msra.mxu0 %v1283
    %1548 = vmatprep.subr.mxu0 0.0
    %1549 = vmatpush1.msra.mxu0 %v1282
    %1550 = vmatprep.subr.mxu0 0.0
    %1551 = vmatpush2.msra.mxu0 0.0
    %1552 = vmatprep.subr.mxu0 0.0
    %1553 = vmatpush2.msra.mxu0 0.0
    %1554 = vmatprep.subr.mxu0 0.0
    %1555 = vmatpush2.msra.mxu0 0.0
    %1556 = vmatprep.subr.mxu0 0.0
    %1557 = vmatpush2.msra.mxu0 0.0
    %1558 = vmatprep.subr.mxu0 0.0
    %1559 = vmatpush2.msra.mxu0 0.0
    %1560 = vmatprep.subr.mxu0 0.0
    %1561 = vmatpush2.msra.mxu0 0.0
    %1562 = vmatprep.subr.mxu0 0.0
    %1563 = vmatpush2.msra.mxu0 0.0
    %1564 = vmatprep.subr.mxu0 0.0
    %1565 = vmatpush2.msra.mxu0 0.0
    %1566 = vmatprep.subr.mxu0 0.0
    %1567 = vmatpush2.msra.mxu0 0.0
    %1568 = vmatprep.subr.mxu0 0.0
    %1569 = vmatpush2.msra.mxu0 0.0
    %1570 = vmatprep.subr.mxu0 0.0
    %1571 = vmatpush2.msra.mxu0 0.0
    %1572 = vmatprep.subr.mxu0 0.0
    %1573 = vmatpush2.msra.mxu0 0.0
    %1574 = vmatprep.subr.mxu0 0.0
    %1575 = vmatpush2.msra.mxu0 0.0
    %1576 = vmatprep.subr.mxu0 0.0
    %1577 = vmatpush2.msra.mxu0 0.0
    %1578 = vmatprep.subr.mxu0 0.0
    %1579 = vmatpush2.msra.mxu0 0.0
    %1580 = vmatprep.subr.mxu0 0.0
    %1581 = vmatpush2.msra.mxu0 0.0
    %1582 = vmatprep.mubr.f32.mxu0 0.0
    %1583 = vmatmul.mubr.f32.gmra.mxu0 %v1307
    %v1584 = vpop.f32.mrf.mxu0
    %v1585 = vadd.f32 %v1515, %v1584
    %v1586 = vpop.f32.mrf.mxu0
    %1587 = vdwg.mxu0
    %vm1588 = vcmp.ge.f32.partialorder %v1585, 0.0
    %v1589 = vmul.f32 %v1585, 0.2
    %v1590 = vsel %vm1588, %v1585, %v1589
    %v1591 = vrot.slane %v1590, 4
    %v1592 = vadd.f32 %v1590, %v1591
    %v1593 = vrot.slane %v1592, 2
    %v1594 = vadd.f32 %v1592, %v1593
    %v1595 = vrot.slane %v1594, 1
    %v1596 = vadd.f32 %v1594, %v1595
    %v1597 = vmul.f32 %v1596, 0.125
    %v1598 = vmul.f32 %v1590, %v1590
    %v1599 = vrot.slane %v1598, 4
    %v1600 = vadd.f32 %v1598, %v1599
    %v1601 = vrot.slane %v1600, 2
    %v1602 = vadd.f32 %v1600, %v1601
    %v1603 = vrot.slane %v1602, 1
    %v1604 = vadd.f32 %v1602, %v1603
    %v1605 = vmul.f32 %v1604, 0.125
    %v1606 = vmul.f32 %v1597, %v1597
    %v1607 = vsub.f32 %v1605, %v1606
    %v1608 = vmax.f32 %v1607, 0.0
    %v1609 = vadd.f32 %v1608, 1e-05
    %v1610 = vrsqrt.pop %v1609
    %v1611 = vmul.f32 %v1299, %v1610
    %v1612 = vmul.f32 %v1597, %v1611
    %v1613 = vsub.f32 %v1300, %v1612
    %v1614 = vmul.f32 %v1590, %v1611
    %v1615 = vadd.f32 %v1614, %v1613
    %1616 = vst [vmem:[#allocation2 + $0x38] sm:$0xff] %v1615
    %v1617 = vld [vmem:[#allocation8 + $0x1000] sm:$0xff]
    %v1618 = vld [vmem:[#allocation8 + $0x1010] sm:$0xff]
    %v1619 = vld [vmem:[#allocation8 + $0x1020] sm:$0xff]
    %v1620 = vld [vmem:[#allocation8 + $0x1030] sm:$0xff]
    %v1621 = vld [vmem:[#allocation8 + $0x1040] sm:$0xff]
    %v1622 = vld [vmem:[#allocation8 + $0x1050] sm:$0xff]
    %v1623 = vld [vmem:[#allocation8 + $0x1060] sm:$0xff]
    %v1624 = vld [vmem:[#allocation8 + $0x1070] sm:$0xff]
    %v1625 = vld [vmem:[#allocation8 + $0x1080] sm:$0xff]
    %v1626 = vld [vmem:[#allocation8 + $0x1090] sm:$0xff]
    %v1627 = vld [vmem:[#allocation8 + $0x10a0] sm:$0xff]
    %v1628 = vld [vmem:[#allocation8 + $0x10b0] sm:$0xff]
    %v1629 = vld [vmem:[#allocation8 + $0x10c0] sm:$0xff]
    %v1630 = vld [vmem:[#allocation8 + $0x10d0] sm:$0xff]
    %v1631 = vld [vmem:[#allocation8 + $0x10e0] sm:$0xff]
    %v1632 = vld [vmem:[#allocation8 + $0x10f0] sm:$0xff]
    %v1633 = vld [vmem:[#allocation8 + $0x1100] sm:$0xff]
    %v1634 = vld [vmem:[#allocation8 + $0x1110] sm:$0xff]
    %v1635 = vld [vmem:[#allocation8 + $0x1120] sm:$0xff]
    %v1636 = vld [vmem:[#allocation8 + $0x1130] sm:$0xff]
    %v1637 = vld [vmem:[#allocation8 + $0x1140] sm:$0xff]
    %v1638 = vld [vmem:[#allocation8 + $0x1150] sm:$0xff]
    %v1639 = vld [vmem:[#allocation8 + $0x1160] sm:$0xff]
    %v1640 = vld [vmem:[#allocation8 + $0x1170] sm:$0xff]
    %v1641 = vld [vmem:[#allocation8 + $0x1180] sm:$0xff]
    %v1642 = vld [vmem:[#allocation8 + $0x1190] sm:$0xff]
    %v1643 = vld [vmem:[#allocation8 + $0x11a0] sm:$0xff]
    %v1644 = vld [vmem:[#allocation8 + $0x11b0] sm:$0xff]
    %v1645 = vld [vmem:[#allocation8 + $0x11c0] sm:$0xff]
    %v1646 = vld [vmem:[#allocation8 + $0x11d0] sm:$0xff]
    %v1647 = vld [vmem:[#allocation8 + $0x11e0] sm:$0xff]
    %v1648 = vld [vmem:[#allocation8 + $0x11f0] sm:$0xff]
    %v1649 = vld [vmem:[#allocation8 + $0x1200] sm:$0xff]
    %v1650 = vld [vmem:[#allocation8 + $0x1210] sm:$0xff]
    %v1651 = vld [vmem:[#allocation8 + $0x1220] sm:$0xff]
    %v1652 = vld [vmem:[#allocation8 + $0x1230] sm:$0xff]
    %v1653 = vld [vmem:[#allocation8 + $0x1240] sm:$0xff]
    %v1654 = vld [vmem:[#allocation8 + $0x1250] sm:$0xff]
    %v1655 = vld [vmem:[#allocation8 + $0x1260] sm:$0xff]
    %v1656 = vld [vmem:[#allocation8 + $0x1270] sm:$0xff]
    %v1657 = vld [vmem:[#allocation8 + $0x1280] sm:$0xff]
    %v1658 = vld [vmem:[#allocation8 + $0x1290] sm:$0xff]
    %v1659 = vld [vmem:[#allocation8 + $0x12a0] sm:$0xff]
    %v1660 = vld [vmem:[#allocation8 + $0x12b0] sm:$0xff]
    %v1661 = vld [vmem:[#allocation8 + $0x12c0] sm:$0xff]
    %v1662 = vld [vmem:[#allocation8 + $0x12d0] sm:$0xff]
    %v1663 = vld [vmem:[#allocation8 + $0x12e0] sm:$0xff]
    %v1664 = vld [vmem:[#allocation8 + $0x12f0] sm:$0xff]
    %v1665 = vld [vmem:[#allocation8 + $0x1300] sm:$0xff]
    %v1666 = vld [vmem:[#allocation8 + $0x1310] sm:$0xff]
    %v1667 = vld [vmem:[#allocation8 + $0x1320] sm:$0xff]
    %v1668 = vld [vmem:[#allocation8 + $0x1330] sm:$0xff]
    %v1669 = vld [vmem:[#allocation8 + $0x1340] sm:$0xff]
    %v1670 = vld [vmem:[#allocation8 + $0x1350] sm:$0xff]
    %v1671 = vld [vmem:[#allocation8 + $0x1360] sm:$0xff]
    %v1672 = vld [vmem:[#allocation8 + $0x1370] sm:$0xff]
    %v1673 = vld [vmem:[#allocation8 + $0x1380] sm:$0xff]
    %v1674 = vld [vmem:[#allocation8 + $0x1390] sm:$0xff]
    %v1675 = vld [vmem:[#allocation8 + $0x13a0] sm:$0xff]
    %v1676 = vld [vmem:[#allocation8 + $0x13b0] sm:$0xff]
    %v1677 = vld [vmem:[#allocation8 + $0x13c0] sm:$0xff]
    %v1678 = vld [vmem:[#allocation8 + $0x13d0] sm:$0xff]
    %v1679 = vld [vmem:[#allocation8 + $0x13e0] sm:$0xff]
    %v1680 = vld [vmem:[#allocation8 + $0x13f0] sm:$0xff]
    %v1681 = vld [vmem:[#allocation8 + $0x1400] sm:$0xff]
    %v1682 = vld [vmem:[#allocation8 + $0x1410] sm:$0xff]
    %v1683 = vld [vmem:[#allocation8 + $0x1420] sm:$0xff]
    %v1684 = vld [vmem:[#allocation8 + $0x1430] sm:$0xff]
    %v1685 = vld [vmem:[#allocation8 + $0x1440] sm:$0xff]
    %v1686 = vld [vmem:[#allocation8 + $0x1450] sm:$0xff]
    %v1687 = vld [vmem:[#allocation8 + $0x1460] sm:$0xff]
    %v1688 = vld [vmem:[#allocation8 + $0x1470] sm:$0xff]
    %v1689 = vld [vmem:[#allocation8 + $0x1480] sm:$0xff]
    %v1690 = vld [vmem:[#allocation8 + $0x1490] sm:$0xff]
    %v1691 = vld [vmem:[#allocation8 + $0x14a0] sm:$0xff]
    %v1692 = vld [vmem:[#allocation8 + $0x14b0] sm:$0xff]
    %v1693 = vld [vmem:[#allocation8 + $0x14c0] sm:$0xff]
    %v1694 = vld [vmem:[#allocation8 + $0x14d0] sm:$0xff]
    %v1695 = vld [vmem:[#allocation8 + $0x14e0] sm:$0xff]
    %v1696 = vld [vmem:[#allocation8 + $0x14f0] sm:$0xff]
    %v1697 = vld [vmem:[#allocation8 + $0x1500] sm:$0xff]
    %v1698 = vld [vmem:[#allocation8 + $0x1510] sm:$0xff]
    %v1699 = vld [vmem:[#allocation8 + $0x1520] sm:$0xff]
    %v1700 = vld [vmem:[#allocation8 + $0x1530] sm:$0xff]
    %v1701 = vld [vmem:[#allocation8 + $0x1540] sm:$0xff]
    %v1702 = vld [vmem:[#allocation8 + $0x1550] sm:$0xff]
    %v1703 = vld [vmem:[#allocation8 + $0x1560] sm:$0xff]
    %v1704 = vld [vmem:[#allocation8 + $0x1570] sm:$0xff]
    %v1705 = vld [vmem:[#allocation8 + $0x1580] sm:$0xff]
    %v1706 = vld [vmem:[#allocation8 + $0x1590] sm:$0xff]
    %v1707 = vld [vmem:[#allocation8 + $0x15a0] sm:$0xff]
    %v1708 = vld [vmem:[#allocation8 + $0x15b0] sm:$0xff]
    %v1709 = vld [vmem:[#allocation8 + $0x15c0] sm:$0xff]
    %v1710 = vld [vmem:[#allocation8 + $0x15d0] sm:$0xff]
    %v1711 = vld [vmem:[#allocation8 + $0x15e0] sm:$0xff]
    %v1712 = vld [vmem:[#allocation8 + $0x15f0] sm:$0xff]
    %v1713 = vld [vmem:[#allocation8 + $0x1600] sm:$0xff]
    %v1714 = vld [vmem:[#allocation8 + $0x1610] sm:$0xff]
    %v1715 = vld [vmem:[#allocation8 + $0x1620] sm:$0xff]
    %v1716 = vld [vmem:[#allocation8 + $0x1630] sm:$0xff]
    %v1717 = vld [vmem:[#allocation8 + $0x1640] sm:$0xff]
    %v1718 = vld [vmem:[#allocation8 + $0x1650] sm:$0xff]
    %v1719 = vld [vmem:[#allocation8 + $0x1660] sm:$0xff]
    %v1720 = vld [vmem:[#allocation8 + $0x1670] sm:$0xff]
    %v1721 = vld [vmem:[#allocation8 + $0x1680] sm:$0xff]
    %v1722 = vld [vmem:[#allocation8 + $0x1690] sm:$0xff]
    %v1723 = vld [vmem:[#allocation8 + $0x16a0] sm:$0xff]
    %v1724 = vld [vmem:[#allocation8 + $0x16b0] sm:$0xff]
    %v1725 = vld [vmem:[#allocation8 + $0x16c0] sm:$0xff]
    %v1726 = vld [vmem:[#allocation8 + $0x16d0] sm:$0xff]
    %v1727 = vld [vmem:[#allocation8 + $0x16e0] sm:$0xff]
    %v1728 = vld [vmem:[#allocation8 + $0x16f0] sm:$0xff]
    %v1729 = vld [vmem:[#allocation8 + $0x1700] sm:$0xff]
    %v1730 = vld [vmem:[#allocation8 + $0x1710] sm:$0xff]
    %v1731 = vld [vmem:[#allocation8 + $0x1720] sm:$0xff]
    %v1732 = vld [vmem:[#allocation8 + $0x1730] sm:$0xff]
    %v1733 = vld [vmem:[#allocation8 + $0x1740] sm:$0xff]
    %v1734 = vld [vmem:[#allocation8 + $0x1750] sm:$0xff]
    %v1735 = vld [vmem:[#allocation8 + $0x1760] sm:$0xff]
    %v1736 = vld [vmem:[#allocation8 + $0x1770] sm:$0xff]
    %v1737 = vld [vmem:[#allocation8 + $0x1780] sm:$0xff]
    %v1738 = vld [vmem:[#allocation8 + $0x1790] sm:$0xff]
    %v1739 = vld [vmem:[#allocation8 + $0x17a0] sm:$0xff]
    %v1740 = vld [vmem:[#allocation8 + $0x17b0] sm:$0xff]
    %v1741 = vld [vmem:[#allocation8 + $0x17c0] sm:$0xff]
    %v1742 = vld [vmem:[#allocation8 + $0x17d0] sm:$0xff]
    %v1743 = vld [vmem:[#allocation8 + $0x17e0] sm:$0xff]
    %v1744 = vld [vmem:[#allocation8 + $0x17f0] sm:$0xff]
    %v1745 = vld [vmem:[#allocation9 + $0x14] ss:$0 sm:$0xff]
    %v1746 = vld [vmem:[#allocation2] sm:$0xff]
    %v1747 = vld [vmem:[#allocation2 + $0x8] sm:$0xff]
    %v1748 = vld [vmem:[#allocation2 + $0x10] sm:$0xff]
    %v1749 = vld [vmem:[#allocation2 + $0x18] sm:$0xff]
    %v1750 = vld [vmem:[#allocation2 + $0x20] sm:$0xff]
    %v1751 = vld [vmem:[#allocation2 + $0x28] sm:$0xff]
    %v1752 = vld [vmem:[#allocation2 + $0x30] sm:$0xff]
    %v1753 = vld [vmem:[#allocation2 + $0x38] sm:$0xff]
    %1754 = vmatprep.subr.mxu0 0.0
    %1755 = vmatpush1.msra.mxu0 %v1632
    %1756 = vmatprep.subr.mxu0 0.0
    %1757 = vmatpush1.msra.mxu0 %v1631
    %1758 = vmatprep.subr.mxu0 0.0
    %1759 = vmatpush1.msra.mxu0 %v1630
    %1760 = vmatprep.subr.mxu0 0.0
    %1761 = vmatpush1.msra.mxu0 %v1629
    %1762 = vmatprep.subr.mxu0 0.0
    %1763 = vmatpush1.msra.mxu0 %v1628
    %1764 = vmatprep.subr.mxu0 0.0
    %1765 = vmatpush1.msra.mxu0 %v1627
    %1766 = vmatprep.subr.mxu0 0.0
    %1767 = vmatpush1.msra.mxu0 %v1626
    %1768 = vmatprep.subr.mxu0 0.0
    %1769 = vmatpush1.msra.mxu0 %v1625
    %1770 = vmatprep.subr.mxu0 0.0
    %1771 = vmatpush1.msra.mxu0 %v1624
    %1772 = vmatprep.subr.mxu0 0.0
    %1773 = vmatpush1.msra.mxu0 %v1623
    %1774 = vmatprep.subr.mxu0 0.0
    %1775 = vmatpush1.msra.mxu0 %v1622
    %1776 = vmatprep.subr.mxu0 0.0
    %1777 = vmatpush1.msra.mxu0 %v1621
    %1778 = vmatprep.subr.mxu0 0.0
    %1779 = vmatpush1.msra.mxu0 %v1620
    %1780 = vmatprep.subr.mxu0 0.0
    %1781 = vmatpush1.msra.mxu0 %v1619
    %1782 = vmatprep.subr.mxu0 0.0
    %1783 = vmatpush1.msra.mxu0 %v1618
    %1784 = vmatprep.subr.mxu0 0.0
    %1785 = vmatpush1.msra.mxu0 %v1617
    %1786 = vmatprep.subr.mxu0 0.0
    %1787 = vmatpush2.msra.mxu0 %v1648
    %1788 = vmatprep.subr.mxu0 0.0
    %1789 = vmatpush2.msra.mxu0 %v1647
    %1790 = vmatprep.subr.mxu0 0.0
    %1791 = vmatpush2.msra.mxu0 %v1646
    %1792 = vmatprep.subr.mxu0 0.0
    %1793 = vmatpush2.msra.mxu0 %v1645
    %1794 = vmatprep.subr.mxu0 0.0
    %1795 = vmatpush2.msra.mxu0 %v1644
    %1796 = vmatprep.subr.mxu0 0.0
    %1797 = vmatpush2.msra.mxu0 %v1643
    %1798 = vmatprep.subr.mxu0 0.0
    %1799 = vmatpush2.msra.mxu0 %v1642
    %1800 = vmatprep.subr.mxu0 0.0
    %1801 = vmatpush2.msra.mxu0 %v1641
    %1802 = vmatprep.subr.mxu0 0.0
    %1803 = vmatpush2.msra.mxu0 %v1640
    %1804 = vmatprep.subr.mxu0 0.0
    %1805 = vmatpush2.msra.mxu0 %v1639
    %1806 = vmatprep.subr.mxu0 0.0
    %1807 = vmatpush2.msra.mxu0 %v1638
    %1808 = vmatprep.subr.mxu0 0.0
    %1809 = vmatpush2.msra.mxu0 %v1637
    %1810 = vmatprep.subr.mxu0 0.0
    %1811 = vmatpush2.msra.mxu0 %v1636
    %1812 = vmatprep.subr.mxu0 0.0
    %1813 = vmatpush2.msra.mxu0 %v1635
    %1814 = vmatprep.subr.mxu0 0.0
    %1815 = vmatpush2.msra.mxu0 %v1634
    %1816 = vmatprep.subr.mxu0 0.0
    %1817 = vmatpush2.msra.mxu0 %v1633
    %1818 = vmatprep.mubr.f32.mxu0 %v1747
    %1819 = vmatmul.mubr.f32.gmra.mxu0 %v1746
    %v1820 = vpop.f32.mrf.mxu0
    %v1821 = vadd.f32 %v1745, %v1820
    %v1822 = vpop.f32.mrf.mxu0
    %1823 = vdwg.mxu0
    %1824 = vmatprep.subr.mxu0 0.0
    %1825 = vmatpush1.msra.mxu0 %v1664
    %1826 = vmatprep.subr.mxu0 0.0
    %1827 = vmatpush1.msra.mxu0 %v1663
    %1828 = vmatprep.subr.mxu0 0.0
    %1829 = vmatpush1.msra.mxu0 %v1662
    %1830 = vmatprep.subr.mxu0 0.0
    %1831 = vmatpush1.msra.mxu0 %v1661
    %1832 = vmatprep.subr.mxu0 0.0
    %1833 = vmatpush1.msra.mxu0 %v1660
    %1834 = vmatprep.subr.mxu0 0.0
    %1835 = vmatpush1.msra.mxu0 %v1659
    %1836 = vmatprep.subr.mxu0 0.0
    %1837 = vmatpush1.msra.mxu0 %v1658
    %1838 = vmatprep.subr.mxu0 0.0
    %1839 = vmatpush1.msra.mxu0 %v1657
    %1840 = vmatprep.subr.mxu0 0.0
    %1841 = vmatpush1.msra.mxu0 %v1656
    %1842 = vmatprep.subr.mxu0 0.0
    %1843 = vmatpush1.msra.mxu0 %v1655
    %1844 = vmatprep.subr.mxu0 0.0
    %1845 = vmatpush1.msra.mxu0 %v1654
    %1846 = vmatprep.subr.mxu0 0.0
    %1847 = vmatpush1.msra.mxu0 %v1653
    %1848 = vmatprep.subr.mxu0 0.0
    %1849 = vmatpush1.msra.mxu0 %v1652
    %1850 = vmatprep.subr.mxu0 0.0
    %1851 = vmatpush1.msra.mxu0 %v1651
    %1852 = vmatprep.subr.mxu0 0.0
    %1853 = vmatpush1.msra.mxu0 %v1650
    %1854 = vmatprep.subr.mxu0 0.0
    %1855 = vmatpush1.msra.mxu0 %v1649
    %1856 = vmatprep.subr.mxu0 0.0
    %1857 = vmatpush2.msra.mxu0 %v1680
    %1858 = vmatprep.subr.mxu0 0.0
    %1859 = vmatpush2.msra.mxu0 %v1679
    %1860 = vmatprep.subr.mxu0 0.0
    %1861 = vmatpush2.msra.mxu0 %v1678
    %1862 = vmatprep.subr.mxu0 0.0
    %1863 = vmatpush2.msra.mxu0 %v1677
    %1864 = vmatprep.subr.mxu0 0.0
    %1865 = vmatpush2.msra.mxu0 %v1676
    %1866 = vmatprep.subr.mxu0 0.0
    %1867 = vmatpush2.msra.mxu0 %v1675
    %1868 = vmatprep.subr.mxu0 0.0
    %1869 = vmatpush2.msra.mxu0 %v1674
    %1870 = vmatprep.subr.mxu0 0.0
    %1871 = vmatpush2.msra.mxu0 %v1673
    %1872 = vmatprep.subr.mxu0 0.0
    %1873 = vmatpush2.msra.mxu0 %v1672
    %1874 = vmatprep.subr.mxu0 0.0
    %1875 = vmatpush2.msra.mxu0 %v1671
    %1876 = vmatprep.subr.mxu0 0.0
    %1877 = vmatpush2.msra.mxu0 %v1670
    %1878 = vmatprep.subr.mxu0 0.0
    %1879 = vmatpush2.msra.mxu0 %v1669
    %1880 = vmatprep.subr.mxu0 0.0
    %1881 = vmatpush2.msra.mxu0 %v1668
    %1882 = vmatprep.subr.mxu0 0.0
    %1883 = vmatpush2.msra.mxu0 %v1667
    %1884 = vmatprep.subr.mxu0 0.0
    %1885 = vmatpush2.msra.mxu0 %v1666
    %1886 = vmatprep.subr.mxu0 0.0
    %1887 = vmatpush2.msra.mxu0 %v1665
    %1888 = vmatprep.mubr.f32.mxu0 %v1749
    %1889 = vmatmul.mubr.f32.gmra.mxu0 %v1748
    %v1890 = vpop.f32.mrf.mxu0
    %v1891 = vadd.f32 %v1821, %v1890
    %v1892 = vpop.f32.mrf.mxu0
    %1893 = vdwg.mxu0
    %1894 = vmatprep.subr.mxu0 0.0
    %1895 = vmatpush1.msra.mxu0 %v1696
    %1896 = vmatprep.subr.mxu0 0.0
    %1897 = vmatpush1.msra.mxu0 %v1695
    %1898 = vmatprep.subr.mxu0 0.0
    %1899 = vmatpush1.msra.mxu0 %v1694
    %1900 = vmatprep.subr.mxu0 0.0
    %1901 = vmatpush1.msra.mxu0 %v1693
    %1902 = vmatprep.subr.mxu0 0.0
    %1903 = vmatpush1.msra.mxu0 %v1692
    %1904 = vmatprep.subr.mxu0 0.0
    %1905 = vmatpush1.msra.mxu0 %v1691
    %1906 = vmatprep.subr.mxu0 0.0
    %1907 = vmatpush1.msra.mxu0 %v1690
    %1908 = vmatprep.subr.mxu0 0.0
    %1909 = vmatpush1.msra.mxu0 %v1689
    %1910 = vmatprep.subr.mxu0 0.0
    %1911 = vmatpush1.msra.mxu0 %v1688
    %1912 = vmatprep.subr.mxu0 0.0
    %1913 = vmatpush1.msra.mxu0 %v1687
    %1914 = vmatprep.subr.mxu0 0.0
    %1915 = vmatpush1.msra.mxu0 %v1686
    %1916 = vmatprep.subr.mxu0 0.0
    %1917 = vmatpush1.msra.mxu0 %v1685
    %1918 = vmatprep.subr.mxu0 0.0
    %1919 = vmatpush1.msra.mxu0 %v1684
    %1920 = vmatprep.subr.mxu0 0.0
    %1921 = vmatpush1.msra.mxu0 %v1683
    %1922 = vmatprep.subr.mxu0 0.0
    %1923 = vmatpush1.msra.mxu0 %v1682
    %1924 = vmatprep.subr.mxu0 0.0
    %1925 = vmatpush1.msra.mxu0 %v1681
    %1926 = vmatprep.subr.mxu0 0.0
    %1927 = vmatpush2.msra.mxu0 %v1712
    %1928 = vmatprep.subr.mxu0 0.0
    %1929 = vmatpush2.msra.mxu0 %v1711
    %1930 = vmatprep.subr.mxu0 0.0
    %1931 = vmatpush2.msra.mxu0 %v1710
    %1932 = vmatprep.subr.mxu0 0.0
    %1933 = vmatpush2.msra.mxu0 %v1709
    %1934 = vmatprep.subr.mxu0 0.0
    %1935 = vmatpush2.msra.mxu0 %v1708
    %1936 = vmatprep.subr.mxu0 0.0
    %1937 = vmatpush2.msra.mxu0 %v1707
    %1938 = vmatprep.subr.mxu0 0.0
    %1939 = vmatpush2.msra.mxu0 %v1706
    %1940 = vmatprep.subr.mxu0 0.0
    %1941 = vmatpush2.msra.mxu0 %v1705
    %1942 = vmatprep.subr.mxu0 0.0
    %1943 = vmatpush2.msra.mxu0 %v1704
    %1944 = vmatprep.subr.mxu0 0.0
    %1945 = vmatpush2.msra.mxu0 %v1703
    %1946 = vmatprep.subr.mxu0 0.0
    %1947 = vmatpush2.msra.mxu0 %v1702
    %1948 = vmatprep.subr.mxu0 0.0
    %1949 = vmatpush2.msra.mxu0 %v1701
    %1950 = vmatprep.subr.mxu0 0.0
    %1951 = vmatpush2.msra.mxu0 %v1700
    %1952 = vmatprep.subr.mxu0 0.0
    %1953 = vmatpush2.msra.mxu0 %v1699
    %1954 = vmatprep.subr.mxu0 0.0
    %1955 = vmatpush2.msra.mxu0 %v1698
    %1956 = vmatprep.subr.mxu0 0.0
    %1957 = vmatpush2.msra.mxu0 %v1697
    %1958 = vmatprep.mubr.f32.mxu0 %v1751
    %1959 = vmatmul.mubr.f32.gmra.mxu0 %v1750
    %v1960 = vpop.f32.mrf.mxu0
    %v1961 = vadd.f32 %v1891, %v1960
    %v1962 = vpop.f32.mrf.mxu0
    %1963 = vdwg.mxu0
    %1964 = vmatprep.subr.mxu0 0.0
    %1965 = vmatpush1.msra.mxu0 %v1728
    %1966 = vmatprep.subr.mxu0 0.0
    %1967 = vmatpush1.msra.mxu0 %v1727
    %1968 = vmatprep.subr.mxu0 0.0
    %1969 = vmatpush1.msra.mxu0 %v1726
    %1970 = vmatprep.subr.mxu0 0.0
    %1971 = vmatpush1.msra.mxu0 %v1725
    %1972 = vmatprep.subr.mxu0 0.0
    %1973 = vmatpush1.msra.mxu0 %v1724
    %1974 = vmatprep.subr.mxu0 0.0
    %1975 = vmatpush1.msra.mxu0 %v1723
    %1976 = vmatprep.subr.mxu0 0.0
    %1977 = vmatpush1.msra.mxu0 %v1722
    %1978 = vmatprep.subr.mxu0 0.0
    %1979 = vmatpush1.msra.mxu0 %v1721
    %1980 = vmatprep.subr.mxu0 0.0
    %1981 = vmatpush1.msra.mxu0 %v1720
    %1982 = vmatprep.subr.mxu0 0.0
    %1983 = vmatpush1.msra.mxu0 %v1719
    %1984 = vmatprep.subr.mxu0 0.0
    %1985 = vmatpush1.msra.mxu0 %v1718
    %1986 = vmatprep.subr.mxu0 0.0
    %1987 = vmatpush1.msra.mxu0 %v1717
    %1988 = vmatprep.subr.mxu0 0.0
    %1989 = vmatpush1.msra.mxu0 %v1716
    %1990 = vmatprep.subr.mxu0 0.0
    %1991 = vmatpush1.msra.mxu0 %v1715
    %1992 = vmatprep.subr.mxu0 0.0
    %1993 = vmatpush1.msra.mxu0 %v1714
    %1994 = vmatprep.subr.mxu0 0.0
    %1995 = vmatpush1.msra.mxu0 %v1713
    %1996 = vmatprep.subr.mxu0 0.0
    %1997 = vmatpush2.msra.mxu0 %v1744
    %1998 = vmatprep.subr.mxu0 0.0
    %1999 = vmatpush2.msra.mxu0 %v1743
    %2000 = vmatprep.subr.mxu0 0.0
    %2001 = vmatpush2.msra.mxu0 %v1742
    %2002 = vmatprep.subr.mxu0 0.0
    %2003 = vmatpush2.msra.mxu0 %v1741
    %2004 = vmatprep.subr.mxu0 0.0
    %2005 = vmatpush2.msra.mxu0 %v1740
    %2006 = vmatprep.subr.mxu0 0.0
    %2007 = vmatpush2.msra.mxu0 %v1739
    %2008 = vmatprep.subr.mxu0 0.0
    %2009 = vmatpush2.msra.mxu0 %v1738
    %2010 = vmatprep.subr.mxu0 0.0
    %2011 = vmatpush2.msra.mxu0 %v1737
    %2012 = vmatprep.subr.mxu0 0.0
    %2013 = vmatpush2.msra.mxu0 %v1736
    %2014 = vmatprep.subr.mxu0 0.0
    %2015 = vmatpush2.msra.mxu0 %v1735
    %2016 = vmatprep.subr.mxu0 0.0
    %2017 = vmatpush2.msra.mxu0 %v1734
    %2018 = vmatprep.subr.mxu0 0.0
    %2019 = vmatpush2.msra.mxu0 %v1733
    %2020 = vmatprep.subr.mxu0 0.0
    %2021 = vmatpush2.msra.mxu0 %v1732
    %2022 = vmatprep.subr.mxu0 0.0
    %2023 = vmatpush2.msra.mxu0 %v1731
    %2024 = vmatprep.subr.mxu0 0.0
    %2025 = vmatpush2.msra.mxu0 %v1730
    %2026 = vmatprep.subr.mxu0 0.0
    %2027 = vmatpush2.msra.mxu0 %v1729
    %2028 = vmatprep.mubr.f32.mxu0 %v1753
    %2029 = vmatmul.mubr.f32.gmra.mxu0 %v1752
    %v2030 = vpop.f32.mrf.mxu0
    %v2031 = vadd.f32 %v1961, %v2030
    %v2032 = vpop.f32.mrf.mxu0
    %2033 = vdwg.mxu0
    %vm2034 = vcmp.ge.f32.partialorder %v2031, 0.0
    %v2035 = vmul.f32 %v2031, 0.2
    %v2036 = vsel %vm2034, %v2031, %v2035
    %v2037 = vld [vmem:[#allocation8 + $0x1800] sm:$0xff]
    %v2038 = vld [vmem:[#allocation8 + $0x1808] sm:$0xff]
    %v2039 = vld [vmem:[#allocation8 + $0x1810] sm:$0xff]
    %v2040 = vld [vmem:[#allocation8 + $0x1818] sm:$0xff]
    %v2041 = vld [vmem:[#allocation8 + $0x1820] sm:$0xff]
    %v2042 = vld [vmem:[#allocation8 + $0x1828] sm:$0xff]
    %v2043 = vld [vmem:[#allocation8 + $0x1830] sm:$0xff]
    %v2044 = vld [vmem:[#allocation8 + $0x1838] sm:$0xff]
    %v2045 = vld [vmem:[#allocation8 + $0x1840] sm:$0xff]
    %v2046 = vld [vmem:[#allocation8 + $0x1848] sm:$0xff]
    %v2047 = vld [vmem:[#allocation8 + $0x1850] sm:$0xff]
    %v2048 = vld [vmem:[#allocation8 + $0x1858] sm:$0xff]
    %v2049 = vld [vmem:[#allocation8 + $0x1860] sm:$0xff]
    %v2050 = vld [vmem:[#allocation8 + $0x1868] sm:$0xff]
    %v2051 = vld [vmem:[#allocation8 + $0x1870] sm:$0xff]
    %v2052 = vld [vmem:[#allocation8 + $0x1878] sm:$0xff]
    %v2053 = vld [vmem:[#allocation8 + $0x1880] sm:$0xff]
    %v2054 = vld [vmem:[#allocation8 + $0x1888] sm:$0xff]
    %v2055 = vld [vmem:[#allocation8 + $0x1890] sm:$0xff]
    %v2056 = vld [vmem:[#allocation8 + $0x1898] sm:$0xff]
    %v2057 = vld [vmem:[#allocation8 + $0x18a0] sm:$0xff]
    %v2058 = vld [vmem:[#allocation8 + $0x18a8] sm:$0xff]
    %v2059 = vld [vmem:[#allocation8 + $0x18b0] sm:$0xff]
    %v2060 = vld [vmem:[#allocation8 + $0x18b8] sm:$0xff]
    %v2061 = vld [vmem:[#allocation8 + $0x18c0] sm:$0xff]
    %v2062 = vld [vmem:[#allocation8 + $0x18c8] sm:$0xff]
    %v2063 = vld [vmem:[#allocation8 + $0x18d0] sm:$0xff]
    %v2064 = vld [vmem:[#allocation8 + $0x18d8] sm:$0xff]
    %v2065 = vld [vmem:[#allocation8 + $0x18e0] sm:$0xff]
    %v2066 = vld [vmem:[#allocation8 + $0x18e8] sm:$0xff]
    %v2067 = vld [vmem:[#allocation8 + $0x18f0] sm:$0xff]
    %v2068 = vld [vmem:[#allocation8 + $0x18f8] sm:$0xff]
    %s2069 = scalar_lea.vmem [#allocation9], 21
    %v2070 = vld [vmem:[%s2069] ss:$8 sm:$0x3]
    %v2072 = vlaneseq
    %v2073 = vshrl.u32 %v2072, 7
    %v2074 = vsub.s32 0, %v2073
    %v2075 = vrot.slane %v2070, %v2074
    %v2076 = vlaneseq
    %v2077 = vshrl.u32 %v2076, 7
    %v2078 = vsub.s32 1, %v2077
    %v2079 = vrot.slane %v2070, %v2078
    %2082 = vmatprep.subr.mxu0 %v2068
    %2083 = vmatpush1.msra.mxu0 %v2067
    %2084 = vmatprep.subr.mxu0 %v2066
    %2085 = vmatpush1.msra.mxu0 %v2065
    %2086 = vmatprep.subr.mxu0 %v2064
    %2087 = vmatpush1.msra.mxu0 %v2063
    %2088 = vmatprep.subr.mxu0 %v2062
    %2089 = vmatpush1.msra.mxu0 %v2061
    %2090 = vmatprep.subr.mxu0 %v2060
    %2091 = vmatpush1.msra.mxu0 %v2059
    %2092 = vmatprep.subr.mxu0 %v2058
    %2093 = vmatpush1.msra.mxu0 %v2057
    %2094 = vmatprep.subr.mxu0 %v2056
    %2095 = vmatpush1.msra.mxu0 %v2055
    %2096 = vmatprep.subr.mxu0 %v2054
    %2097 = vmatpush1.msra.mxu0 %v2053
    %2098 = vmatprep.subr.mxu0 %v2052
    %2099 = vmatpush1.msra.mxu0 %v2051
    %2100 = vmatprep.subr.mxu0 %v2050
    %2101 = vmatpush1.msra.mxu0 %v2049
    %2102 = vmatprep.subr.mxu0 %v2048
    %2103 = vmatpush1.msra.mxu0 %v2047
    %2104 = vmatprep.subr.mxu0 %v2046
    %2105 = vmatpush1.msra.mxu0 %v2045
    %2106 = vmatprep.subr.mxu0 %v2044
    %2107 = vmatpush1.msra.mxu0 %v2043
    %2108 = vmatprep.subr.mxu0 %v2042
    %2109 = vmatpush1.msra.mxu0 %v2041
    %2110 = vmatprep.subr.mxu0 %v2040
    %2111 = vmatpush1.msra.mxu0 %v2039
    %2112 = vmatprep.subr.mxu0 %v2038
    %2113 = vmatpush1.msra.mxu0 %v2037
    %2114 = vmatprep.subr.mxu0 0.0
    %2115 = vmatpush2.msra.mxu0 0.0
    %2116 = vmatprep.subr.mxu0 0.0
    %2117 = vmatpush2.msra.mxu0 0.0
    %2118 = vmatprep.subr.mxu0 0.0
    %2119 = vmatpush2.msra.mxu0 0.0
    %2120 = vmatprep.subr.mxu0 0.0
    %2121 = vmatpush2.msra.mxu0 0.0
    %2122 = vmatprep.subr.mxu0 0.0
    %2123 = vmatpush2.msra.mxu0 0.0
    %2124 = vmatprep.subr.mxu0 0.0
    %2125 = vmatpush2.msra.mxu0 0.0
    %2126 = vmatprep.subr.mxu0 0.0
    %2127 = vmatpush2.msra.mxu0 0.0
    %2128 = vmatprep.subr.mxu0 0.0
    %2129 = vmatpush2.msra.mxu0 0.0
    %2130 = vmatprep.subr.mxu0 0.0
    %2131 = vmatpush2.msra.mxu0 0.0
    %2132 = vmatprep.subr.mxu0 0.0
    %2133 = vmatpush2.msra.mxu0 0.0
    %2134 = vmatprep.subr.mxu0 0.0
    %2135 = vmatpush2.msra.mxu0 0.0
    %2136 = vmatprep.subr.mxu0 0.0
    %2137 = vmatpush2.msra.mxu0 0.0
    %2138 = vmatprep.subr.mxu0 0.0
    %2139 = vmatpush2.msra.mxu0 0.0
    %2140 = vmatprep.subr.mxu0 0.0
    %2141 = vmatpush2.msra.mxu0 0.0
    %2142 = vmatprep.subr.mxu0 0.0
    %2143 = vmatpush2.msra.mxu0 0.0
    %2144 = vmatprep.subr.mxu0 0.0
    %2145 = vmatpush2.msra.mxu0 0.0
    %2146 = vmatprep.mubr.f32.mxu0 0.0
    %2147 = vmatmul.mubr.f32.gmra.mxu0 %v2036
    %v2148 = vpop.f32.mrf.mxu0
    %v2149 = vadd.f32 %v2075, %v2148
    %v2150 = vpop.f32.mrf.mxu0
    %v2151 = vadd.f32 %v2079, %v2150
    %2152 = vdwg.mxu0
    %v2153 = vld [vmem:[#allocation6] sm:$0xff]
    %v2154 = vmul.f32 %v2151, 0.5
    %v2155 = vmul.f32 %v2154, 1.442695
    %v2156 = vpow.pop %v2155
    %v2157 = vmul.f32 %v2153, %v2156
    %v2158 = vadd.f32 %v2157, %v2149
    %2159 = vst [vmem:[#allocation11] sm:$0xff] %v2158
    // Predicated region
    $region34: #{tpu_custom_call.1} parent=1 // pred_check
      _
    $region35: #{tpu_custom_call.1} parent=1 // pred_check_branch
      %2161 = sbr.rel (0) target = $region37
    $region36: #{tpu_custom_call.1} parent=1 // pred_region
      %s2163 = ssub.s32 128, 128
      %2164 = vsyncadd [#allocation5], %s2163
      %s2166 = sshll.u32 [#allocation11], 4
      %s2167 = int_to_ptr.vmem [resolvable:$true] %s2166
      %2169 = dma.vmem_to_hbm [thread:$0]  %s2167, 128, %s4, [#allocation5]
    $region37: #{tpu_custom_call.1} parent=1 // pred_fallthru
      _
    // Predicated region
    $region38: #{tpu_custom_call.1} parent=1 // pred_check
      _
    $region39: #{tpu_custom_call.1} parent=1 // pred_check_branch
      %2171 = sbr.rel (0) target = $region41
    $region40: #{tpu_custom_call.1} parent=1 // pred_region
      %2172 = dma.done [#allocation5], 128
    $region41: #{tpu_custom_call.1} parent=1 // pred_fallthru
      _
    %2173 = vsyncpa [#allocation4], 1
    %2174 = vsyncpa [#allocation7], 1
    %2175 = vsyncpa [#allocation10], 1
    %2176 = vsyncpa [#allocation5], 1

</llo_original>
